<compile_context>
chip_gen: v5e
topology: v5e:2x2
jax: 0.10.0
libtpu: 0.0.40
codegen_flags: <defaults>
</compile_context>

<pallas_src>
import functools

import jax
import jax.numpy as jnp
from jax.experimental import pallas as pl
from jax.experimental.pallas import tpu as pltpu


def conv_block_kernel(x_ref, w_ref, o_ref, *, K, stride, pad, H, W, Ho, Wo, eps,
                      use_bf16):
    """One grid step == `bt` batch elements.

    x_ref : (bt, Cin, H, W)        unpadded input images
    w_ref : (Cout, K*K*Cin)        conv weight, tap-major / cin-minor packing
    o_ref : (bt, Cout, Ho*Wo)      lane-dense output (flattened spatial)
    """
    bt, cin = x_ref.shape[0], x_ref.shape[1]
    cout = w_ref.shape[0]
    Hp = H + 2 * pad
    Wp = W + 2 * pad
    P = Ho * Wo
    # One extra zero row so the contiguous flat tap windows stay in range.
    extra = 1 if stride == 1 else 0

    # Weight loaded / cast once per grid step (shared across the batch tile).
    w = w_ref[...]
    if use_bf16:
        w = w.astype(jnp.bfloat16)

    # Zero-padding blocks hoisted out of the per-image loop (no CSE in-loop).
    top = jnp.zeros((cin, pad, W), jnp.float32) if pad > 0 else None
    bot_rows = pad + extra
    bot = jnp.zeros((cin, bot_rows, W), jnp.float32) if bot_rows > 0 else None
    side = jnp.zeros((cin, Hp + extra, pad), jnp.float32) if pad > 0 else None

    for b in range(bt):
        xb = x_ref[b].astype(jnp.float32)                      # (cin, H, W)

        # In-kernel zero padding (padding_mode='zeros'); avoids a wrapper-side
        # jnp.pad that would re-read/re-write all of x in HBM.
        pieces = []
        if top is not None:
            pieces.append(top)
        pieces.append(xb)
        if bot is not None:
            pieces.append(bot)
        xv = jnp.concatenate(pieces, axis=1) if len(pieces) > 1 else xb
        if side is not None:
            xv = jnp.concatenate([side, xv, side], axis=2)     # (cin, Hp+extra, Wp)

        if stride == 1:
            # Flatten spatial onto the lane axis: each (kh, kw) tap window is a
            # contiguous lane slice (cheap shift) rather than a strided 2-D
            # slice + relayout reshape.
            L = (Hp + extra) * Wp
            xflat = xv.reshape(cin, L)
            Pw = Ho * Wp
            patches = jnp.concatenate(
                [xflat[:, kh * Wp + kw: kh * Wp + kw + Pw]
                 for kh in range(K) for kw in range(K)],
                axis=0)                                        # (K*K*cin, Ho*Wp)
        else:
            # Generic-stride fallback: strided 2-D tap slices, still one matmul.
            patches = jnp.concatenate(
                [xv[:, kh:kh + stride * Ho:stride, kw:kw + stride * Wo:stride]
                 .reshape(cin, P)
                 for kh in range(K) for kw in range(K)],
                axis=0)                                        # (K*K*cin, Ho*Wo)

        if use_bf16:
            patches = patches.astype(jnp.bfloat16)

        # Single im2col-style MXU matmul with f32 accumulation.
        acc = jnp.dot(w, patches, preferred_element_type=jnp.float32)

        if stride == 1:
            # Drop the K-1 invalid columns of each output row -> (cout, Ho*Wo).
            acc = acc.reshape(cout, Ho, Wp)[:, :, :Wo].reshape(cout, P)

        # Conv bias intentionally omitted: InstanceNorm2d(affine=False) removes
        # any per-channel constant exactly (it only shifts the mean).

        # InstanceNorm2d (affine=False, biased variance), single pass.
        inv_n = 1.0 / P
        mean = jnp.sum(acc, axis=1, keepdims=True) * inv_n
        ex2 = jnp.sum(acc * acc, axis=1, keepdims=True) * inv_n
        var = ex2 - mean * mean
        y = (acc - mean) * jax.lax.rsqrt(var + eps)

        # ReLU + lane-dense store.
        o_ref[b] = jnp.maximum(y, 0.0).astype(o_ref.dtype)


def conv_block(x, weight, bias=None, *, stride=1, padding=1, eps=1e-5,
               use_bf16_matmul=False, batch_tile=None):
    """ConvBlock forward: Conv2d(zero pad) + InstanceNorm2d + ReLU.

    x:      (N, Cin, H, W) float32
    weight: (Cout, Cin, K, K)
    bias:   (Cout,) — accepted for API parity; mathematically cancelled by the
            affine-free InstanceNorm, so it is not plumbed into the kernel.
    """
    del bias  # cancelled exactly by InstanceNorm2d(affine=False)

    N, Cin, H, W = x.shape
    Cout, Cin_w, K, K2 = weight.shape
    assert Cin_w == Cin and K == K2
    Ho = (H + 2 * padding - K) // stride + 1
    Wo = (W + 2 * padding - K) // stride + 1

    # Repack the weight so it matches the in-kernel patch ordering:
    # row index = (kh*K + kw)*Cin + cin.
    w2 = jnp.transpose(weight, (0, 2, 3, 1)).reshape(Cout, K * K * Cin)
    w2 = w2.astype(jnp.float32)

    if batch_tile is None:
        # Amortize per-grid-step overhead for small batches.
        batch_tile = next(bt for bt in (4, 2, 1) if bt <= N and N % bt == 0)
    assert N % batch_tile == 0, "batch_tile must divide N"

    kernel = functools.partial(
        conv_block_kernel, K=K, stride=stride, pad=padding, H=H, W=W,
        Ho=Ho, Wo=Wo, eps=eps, use_bf16=use_bf16_matmul)

    out_flat = pl.pallas_call(
        kernel,
        out_shape=jax.ShapeDtypeStruct((N, Cout, Ho * Wo), x.dtype),
        grid_spec=pltpu.PrefetchScalarGridSpec(
            num_scalar_prefetch=0,
            grid=(N // batch_tile,),
            in_specs=[
                pl.BlockSpec((batch_tile, Cin, H, W), lambda n: (n, 0, 0, 0)),
                pl.BlockSpec((Cout, K * K * Cin), lambda n: (0, 0)),
            ],
            out_specs=pl.BlockSpec((batch_tile, Cout, Ho * Wo),
                                   lambda n: (n, 0, 0)),
        ),
        compiler_params=pltpu.CompilerParams(
            dimension_semantics=("parallel",),
            vmem_limit_bytes=32 * 1024 * 1024,
        ),
    )(x, w2)

    # Contiguous reshape back to NCHW (free) — keeps the in-kernel store lane-dense.
    return out_flat.reshape(N, Cout, Ho, Wo)


def _reference(x, weight, bias, *, stride=1, padding=1, eps=1e-5):
    """Pure-JAX reference matching PyTorch ConvBlock semantics (incl. bias)."""
    y = jax.lax.conv_general_dilated(
        x, weight, (stride, stride), [(padding, padding), (padding, padding)],
        dimension_numbers=("NCHW", "OIHW", "NCHW"))
    y = y + bias[None, :, None, None]
    mean = jnp.mean(y, axis=(2, 3), keepdims=True)
    var = jnp.mean((y - mean) ** 2, axis=(2, 3), keepdims=True)
    y = (y - mean) / jnp.sqrt(var + eps)
    return jnp.maximum(y, 0.0)


if __name__ == "__main__":
    # ConvBlock(in_channels=4, out_channels=8, kernel_size=3, stride=1,
    #           padding=1, normalization=INSTANCE, padding=ZERO,
    #           activation=RELU, bias=True)
    N, Cin, Cout, H, W, K = 2, 4, 8, 16, 16, 3
    stride, padding = 1, 1

    key = jax.random.PRNGKey(0)
    kx, kw, kb = jax.random.split(key, 3)
    x = jax.random.normal(kx, (N, Cin, H, W), dtype=jnp.float32)
    fan_in = Cin * K * K
    weight = jax.random.normal(kw, (Cout, Cin, K, K), dtype=jnp.float32) / (fan_in ** 0.5)
    bias = jax.random.normal(kb, (Cout,), dtype=jnp.float32) * 0.1

    ref = _reference(x, weight, bias, stride=stride, padding=padding)

    # f32 matmul path (default): must match PyTorch semantics tightly.
    out = jax.block_until_ready(
        conv_block(x, weight, bias, stride=stride, padding=padding))
    assert out.shape == (N, Cout, H, W)
    err = float(jnp.max(jnp.abs(out - ref)))
    assert err < 1e-4, f"f32 path max err {err}"

    # bf16-operand matmul path (f32 accumulation): looser tolerance.
    out_bf16 = jax.block_until_ready(
        conv_block(x, weight, bias, stride=stride, padding=padding,
                   use_bf16_matmul=True))
    err_bf16 = float(jnp.max(jnp.abs(out_bf16 - ref)))
    assert err_bf16 < 5e-2, f"bf16 path max err {err_bf16}"

    print("KERNEL_OK")
</pallas_src>

<mosaic_0001>
module attributes {stable_mosaic.version = 11 : i64} {
  func.func @conv_block_kernel(%arg0: i32, %arg1: memref<2x4x16x16xf32, #tpu.memory_space<vmem>>, %arg2: memref<8x36xf32, #tpu.memory_space<vmem>>, %arg3: memref<2x8x256xf32, #tpu.memory_space<vmem>>) attributes {dimension_semantics = [#tpu.dimension_semantics<parallel>], iteration_bounds = array<i64: 1>, scalar_prefetch = 0 : i64, scratch_operands = 0 : i64, tpu.core_type = #tpu.core_type<tc>, window_params = [{transform_indices = @transform_0, window_bounds = array<i64: 2, 4, 16, 16>}, {pipeline_mode = #tpu.pipeline_mode<synchronous>, transform_indices = @transform_1, window_bounds = array<i64: 8, 36>}, {transform_indices = @transform_2, window_bounds = array<i64: 2, 8, 256>}]} {
    %c0 = arith.constant 0 : index
    %c0_0 = arith.constant 0 : index
    %0 = vector.load %arg2[%c0, %c0_0] : memref<8x36xf32, #tpu.memory_space<vmem>>, vector<8x36xf32>
    %cst = arith.constant 0.000000e+00 : f32
    %1 = vector.broadcast %cst : f32 to vector<4x1x16xf32>
    %cst_1 = arith.constant 0.000000e+00 : f32
    %2 = vector.broadcast %cst_1 : f32 to vector<4x2x16xf32>
    %cst_2 = arith.constant 0.000000e+00 : f32
    %3 = vector.broadcast %cst_2 : f32 to vector<4x19x1xf32>
    %c0_3 = arith.constant 0 : index
    %c0_4 = arith.constant 0 : index
    %c0_5 = arith.constant 0 : index
    %c0_6 = arith.constant 0 : index
    %4 = vector.load %arg1[%c0_3, %c0_4, %c0_5, %c0_6] : memref<2x4x16x16xf32, #tpu.memory_space<vmem>>, vector<1x4x16x16xf32>
    %5 = vector.shape_cast %4 : vector<1x4x16x16xf32> to vector<4x16x16xf32>
    %6 = tpu.concatenate %1, %5, %2 in 1 : vector<4x1x16xf32>, vector<4x16x16xf32>, vector<4x2x16xf32> -> vector<4x19x16xf32>
    %7 = tpu.concatenate %3, %6, %3 in 2 : vector<4x19x1xf32>, vector<4x19x16xf32>, vector<4x19x1xf32> -> vector<4x19x18xf32>
    %8 = vector.shape_cast %7 : vector<4x19x18xf32> to vector<4x342xf32>
    %9 = vector.extract_strided_slice %8 {offsets = [0, 0], sizes = [4, 288], strides = [1, 1]} : vector<4x342xf32> to vector<4x288xf32>
    %10 = vector.extract_strided_slice %8 {offsets = [0, 1], sizes = [4, 288], strides = [1, 1]} : vector<4x342xf32> to vector<4x288xf32>
    %11 = vector.extract_strided_slice %8 {offsets = [0, 2], sizes = [4, 288], strides = [1, 1]} : vector<4x342xf32> to vector<4x288xf32>
    %12 = vector.extract_strided_slice %8 {offsets = [0, 18], sizes = [4, 288], strides = [1, 1]} : vector<4x342xf32> to vector<4x288xf32>
    %13 = vector.extract_strided_slice %8 {offsets = [0, 19], sizes = [4, 288], strides = [1, 1]} : vector<4x342xf32> to vector<4x288xf32>
    %14 = vector.extract_strided_slice %8 {offsets = [0, 20], sizes = [4, 288], strides = [1, 1]} : vector<4x342xf32> to vector<4x288xf32>
    %15 = vector.extract_strided_slice %8 {offsets = [0, 36], sizes = [4, 288], strides = [1, 1]} : vector<4x342xf32> to vector<4x288xf32>
    %16 = vector.extract_strided_slice %8 {offsets = [0, 37], sizes = [4, 288], strides = [1, 1]} : vector<4x342xf32> to vector<4x288xf32>
    %17 = vector.extract_strided_slice %8 {offsets = [0, 38], sizes = [4, 288], strides = [1, 1]} : vector<4x342xf32> to vector<4x288xf32>
    %18 = tpu.concatenate %9, %10, %11, %12, %13, %14, %15, %16, %17 in 0 : vector<4x288xf32>, vector<4x288xf32>, vector<4x288xf32>, vector<4x288xf32>, vector<4x288xf32>, vector<4x288xf32>, vector<4x288xf32>, vector<4x288xf32>, vector<4x288xf32> -> vector<36x288xf32>
    %cst_7 = arith.constant dense<0.000000e+00> : vector<8x288xf32>
    %19 = tpu.matmul %0, %18, %cst_7 {dimension_numbers = #tpu.dot_dimension_numbers<[1], [0], [0], [1], [0, 0, 1, 1], [], []>} : vector<8x36xf32>, vector<36x288xf32>, vector<8x288xf32> -> vector<8x288xf32>
    %20 = vector.shape_cast %19 : vector<8x288xf32> to vector<8x16x18xf32>
    %21 = vector.extract_strided_slice %20 {offsets = [0, 0, 0], sizes = [8, 16, 16], strides = [1, 1, 1]} : vector<8x16x18xf32> to vector<8x16x16xf32>
    %22 = vector.shape_cast %21 : vector<8x16x16xf32> to vector<8x256xf32>
    %cst_8 = arith.constant dense<0.000000e+00> : vector<8xf32>
    %23 = vector.multi_reduction <add>, %22, %cst_8 [1] : vector<8x256xf32> to vector<8xf32>
    %24 = vector.shape_cast %23 : vector<8xf32> to vector<8x1xf32>
    %cst_9 = arith.constant 3.906250e-03 : f32
    %25 = vector.broadcast %cst_9 : f32 to vector<8x1xf32>
    %26 = arith.mulf %24, %25 : vector<8x1xf32>
    %27 = arith.mulf %22, %22 : vector<8x256xf32>
    %cst_10 = arith.constant dense<0.000000e+00> : vector<8xf32>
    %28 = vector.multi_reduction <add>, %27, %cst_10 [1] : vector<8x256xf32> to vector<8xf32>
    %29 = vector.shape_cast %28 : vector<8xf32> to vector<8x1xf32>
    %cst_11 = arith.constant 3.906250e-03 : f32
    %30 = vector.broadcast %cst_11 : f32 to vector<8x1xf32>
    %31 = arith.mulf %29, %30 : vector<8x1xf32>
    %32 = arith.mulf %26, %26 : vector<8x1xf32>
    %33 = arith.subf %31, %32 : vector<8x1xf32>
    %34 = vector.broadcast %26 : vector<8x1xf32> to vector<8x256xf32>
    %35 = arith.subf %22, %34 : vector<8x256xf32>
    %cst_12 = arith.constant 9.99999974E-6 : f32
    %36 = vector.broadcast %cst_12 : f32 to vector<8x1xf32>
    %37 = arith.addf %33, %36 : vector<8x1xf32>
    %38 = math.rsqrt %37 : vector<8x1xf32>
    %39 = vector.broadcast %38 : vector<8x1xf32> to vector<8x256xf32>
    %40 = arith.mulf %35, %39 : vector<8x256xf32>
    %cst_13 = arith.constant 0.000000e+00 : f32
    %41 = vector.broadcast %cst_13 : f32 to vector<8x256xf32>
    %42 = arith.maximumf %40, %41 : vector<8x256xf32>
    %c0_14 = arith.constant 0 : index
    %c0_15 = arith.constant 0 : index
    %c0_16 = arith.constant 0 : index
    %43 = vector.load %arg3[%c0_14, %c0_15, %c0_16] : memref<2x8x256xf32, #tpu.memory_space<vmem>>, vector<1x8x256xf32>
    %44 = vector.shape_cast %43 : vector<1x8x256xf32> to vector<8x256xf32>
    %45 = vector.shape_cast %42 : vector<8x256xf32> to vector<1x8x256xf32>
    tpu.vector_store %arg3[%c0_14, %c0_15, %c0_16], %45 {strides = array<i32>} : memref<2x8x256xf32, #tpu.memory_space<vmem>>, vector<1x8x256xf32>,
    %c1 = arith.constant 1 : index
    %c0_17 = arith.constant 0 : index
    %c0_18 = arith.constant 0 : index
    %c0_19 = arith.constant 0 : index
    %46 = vector.load %arg1[%c1, %c0_17, %c0_18, %c0_19] : memref<2x4x16x16xf32, #tpu.memory_space<vmem>>, vector<1x4x16x16xf32>
    %47 = vector.shape_cast %46 : vector<1x4x16x16xf32> to vector<4x16x16xf32>
    %48 = tpu.concatenate %1, %47, %2 in 1 : vector<4x1x16xf32>, vector<4x16x16xf32>, vector<4x2x16xf32> -> vector<4x19x16xf32>
    %49 = tpu.concatenate %3, %48, %3 in 2 : vector<4x19x1xf32>, vector<4x19x16xf32>, vector<4x19x1xf32> -> vector<4x19x18xf32>
    %50 = vector.shape_cast %49 : vector<4x19x18xf32> to vector<4x342xf32>
    %51 = vector.extract_strided_slice %50 {offsets = [0, 0], sizes = [4, 288], strides = [1, 1]} : vector<4x342xf32> to vector<4x288xf32>
    %52 = vector.extract_strided_slice %50 {offsets = [0, 1], sizes = [4, 288], strides = [1, 1]} : vector<4x342xf32> to vector<4x288xf32>
    %53 = vector.extract_strided_slice %50 {offsets = [0, 2], sizes = [4, 288], strides = [1, 1]} : vector<4x342xf32> to vector<4x288xf32>
    %54 = vector.extract_strided_slice %50 {offsets = [0, 18], sizes = [4, 288], strides = [1, 1]} : vector<4x342xf32> to vector<4x288xf32>
    %55 = vector.extract_strided_slice %50 {offsets = [0, 19], sizes = [4, 288], strides = [1, 1]} : vector<4x342xf32> to vector<4x288xf32>
    %56 = vector.extract_strided_slice %50 {offsets = [0, 20], sizes = [4, 288], strides = [1, 1]} : vector<4x342xf32> to vector<4x288xf32>
    %57 = vector.extract_strided_slice %50 {offsets = [0, 36], sizes = [4, 288], strides = [1, 1]} : vector<4x342xf32> to vector<4x288xf32>
    %58 = vector.extract_strided_slice %50 {offsets = [0, 37], sizes = [4, 288], strides = [1, 1]} : vector<4x342xf32> to vector<4x288xf32>
    %59 = vector.extract_strided_slice %50 {offsets = [0, 38], sizes = [4, 288], strides = [1, 1]} : vector<4x342xf32> to vector<4x288xf32>
    %60 = tpu.concatenate %51, %52, %53, %54, %55, %56, %57, %58, %59 in 0 : vector<4x288xf32>, vector<4x288xf32>, vector<4x288xf32>, vector<4x288xf32>, vector<4x288xf32>, vector<4x288xf32>, vector<4x288xf32>, vector<4x288xf32>, vector<4x288xf32> -> vector<36x288xf32>
    %cst_20 = arith.constant dense<0.000000e+00> : vector<8x288xf32>
    %61 = tpu.matmul %0, %60, %cst_20 {dimension_numbers = #tpu.dot_dimension_numbers<[1], [0], [0], [1], [0, 0, 1, 1], [], []>} : vector<8x36xf32>, vector<36x288xf32>, vector<8x288xf32> -> vector<8x288xf32>
    %62 = vector.shape_cast %61 : vector<8x288xf32> to vector<8x16x18xf32>
    %63 = vector.extract_strided_slice %62 {offsets = [0, 0, 0], sizes = [8, 16, 16], strides = [1, 1, 1]} : vector<8x16x18xf32> to vector<8x16x16xf32>
    %64 = vector.shape_cast %63 : vector<8x16x16xf32> to vector<8x256xf32>
    %cst_21 = arith.constant dense<0.000000e+00> : vector<8xf32>
    %65 = vector.multi_reduction <add>, %64, %cst_21 [1] : vector<8x256xf32> to vector<8xf32>
    %66 = vector.shape_cast %65 : vector<8xf32> to vector<8x1xf32>
    %cst_22 = arith.constant 3.906250e-03 : f32
    %67 = vector.broadcast %cst_22 : f32 to vector<8x1xf32>
    %68 = arith.mulf %66, %67 : vector<8x1xf32>
    %69 = arith.mulf %64, %64 : vector<8x256xf32>
    %cst_23 = arith.constant dense<0.000000e+00> : vector<8xf32>
    %70 = vector.multi_reduction <add>, %69, %cst_23 [1] : vector<8x256xf32> to vector<8xf32>
    %71 = vector.shape_cast %70 : vector<8xf32> to vector<8x1xf32>
    %cst_24 = arith.constant 3.906250e-03 : f32
    %72 = vector.broadcast %cst_24 : f32 to vector<8x1xf32>
    %73 = arith.mulf %71, %72 : vector<8x1xf32>
    %74 = arith.mulf %68, %68 : vector<8x1xf32>
    %75 = arith.subf %73, %74 : vector<8x1xf32>
    %76 = vector.broadcast %68 : vector<8x1xf32> to vector<8x256xf32>
    %77 = arith.subf %64, %76 : vector<8x256xf32>
    %cst_25 = arith.constant 9.99999974E-6 : f32
    %78 = vector.broadcast %cst_25 : f32 to vector<8x1xf32>
    %79 = arith.addf %75, %78 : vector<8x1xf32>
    %80 = math.rsqrt %79 : vector<8x1xf32>
    %81 = vector.broadcast %80 : vector<8x1xf32> to vector<8x256xf32>
    %82 = arith.mulf %77, %81 : vector<8x256xf32>
    %cst_26 = arith.constant 0.000000e+00 : f32
    %83 = vector.broadcast %cst_26 : f32 to vector<8x256xf32>
    %84 = arith.maximumf %82, %83 : vector<8x256xf32>
    %c1_27 = arith.constant 1 : index
    %c0_28 = arith.constant 0 : index
    %c0_29 = arith.constant 0 : index
    %85 = vector.load %arg3[%c1_27, %c0_28, %c0_29] : memref<2x8x256xf32, #tpu.memory_space<vmem>>, vector<1x8x256xf32>
    %86 = vector.shape_cast %85 : vector<1x8x256xf32> to vector<8x256xf32>
    %87 = vector.shape_cast %84 : vector<8x256xf32> to vector<1x8x256xf32>
    tpu.vector_store %arg3[%c1_27, %c0_28, %c0_29], %87 {strides = array<i32>} : memref<2x8x256xf32, #tpu.memory_space<vmem>>, vector<1x8x256xf32>,
    return
  }
  func.func @transform_0(%arg0: i32) -> (i32, i32, i32, i32) {
    %c0_i32 = arith.constant 0 : i32
    %c0_i32_0 = arith.constant 0 : i32
    %c0_i32_1 = arith.constant 0 : i32
    %c0_i32_2 = arith.constant 0 : i32
    return %arg0, %c0_i32, %c0_i32_0, %c0_i32_1 : i32, i32, i32, i32
  }
  func.func @transform_1(%arg0: i32) -> (i32, i32) {
    %c0_i32 = arith.constant 0 : i32
    %c0_i32_0 = arith.constant 0 : i32
    %c0_i32_1 = arith.constant 0 : i32
    return %c0_i32, %c0_i32_0 : i32, i32
  }
  func.func @transform_2(%arg0: i32) -> (i32, i32, i32) {
    %c0_i32 = arith.constant 0 : i32
    %c0_i32_0 = arith.constant 0 : i32
    %c0_i32_1 = arith.constant 0 : i32
    return %arg0, %c0_i32, %c0_i32_0 : i32, i32, i32
  }
}

</mosaic_0001>

<llo_original>
// kernel: tpu_custom_call.1
$region0: #{tpu_custom_call.1}
  #allocation0 [shape = 'u32[]', space=smem, size = 0x4, offset = 0x4, fixed_abs, tag = 'smem constant byte address 0x4 - core index']
  #allocation1 [shape = 'u32[72,128]{1,0:T(1,128)}', space=vmem, size = 0x9000, scoped, tag = 'internal scratch']
  %s0 = inlined_call_operand.hbm [shape: f32[2,4,16,16], index: 0, kind: input, shape index: {}]
  %s1 = inlined_call_operand.hbm [shape: f32[8,36], index: 1, kind: input, shape index: {}]
  %s2 = inlined_call_operand.hbm [shape: f32[2,8,256], index: 2, kind: output, shape index: {}]
  %s3 = sld [smem:[#allocation0]]
  $region26: #{tpu_custom_call.1} parent=0
    _
  %s5 = ssub.s32 1, %s3
  %s6 = scalar_select 0, %s5, %s3
  $region1: #{tpu_custom_call.1} parent=0
    #allocation2 [shape = 'u8[65536]{0}', space=vmem, size = 0x10000, scoped, tag = 'input window, operand 0, single buffered']
    #allocation3 [shape = 's32[1]{0}', space=sflag, size = 0x4, scoped, tag = 'scoped memory for tpu_custom_call.1']
    #allocation4 [shape = 's32[1]{0}', space=sflag, size = 0x4, scoped, tag = 'scoped memory for tpu_custom_call.1']
    #allocation5 [shape = 'u8[4096]{0}', space=vmem, size = 0x1000, scoped, tag = 'input window, operand 1, single buffered']
    #allocation6 [shape = 's32[1]{0}', space=sflag, size = 0x4, scoped, tag = 'scoped memory for tpu_custom_call.1']
    #allocation7 [shape = 'u8[16384]{0}', space=vmem, size = 0x4000, scoped, tag = 'output window, operand 0, single buffered']
    %7 = vsyncpa [#allocation3], 0
    %8 = vsyncpa [#allocation6], 0
    %9 = vsyncpa [#allocation4], 0
    // Predicated region
    $region2: #{tpu_custom_call.1} parent=1 // pred_check
      _
    $region3: #{tpu_custom_call.1} parent=1 // pred_check_branch
      %11 = sbr.rel (0) target = $region5
    $region4: #{tpu_custom_call.1} parent=1 // pred_region
      %13 = vsyncadd [#allocation3], 0
      %s14 = sshll.u32 %s0, 4
      %s15 = int_to_ptr.hbm [resolvable:$true] %s14
      %s16 = sshll.u32 [#allocation2], 4
      %s17 = int_to_ptr.vmem [resolvable:$true] %s16
      %22 = dma.hbm_to_vmem [thread:$0]  %s15, 2048, %s17, [#allocation3], 128, 128, 8
    $region5: #{tpu_custom_call.1} parent=1 // pred_fallthru
      _
    // Predicated region
    $region6: #{tpu_custom_call.1} parent=1 // pred_check
      _
    $region7: #{tpu_custom_call.1} parent=1 // pred_check_branch
      %24 = sbr.rel (0) target = $region9
    $region8: #{tpu_custom_call.1} parent=1 // pred_region
      %26 = vsyncadd [#allocation6], 0
      %s28 = sshll.u32 %s1, 4
      %s29 = int_to_ptr.hbm [resolvable:$true] %s28
      %s30 = sshll.u32 [#allocation5], 4
      %s31 = int_to_ptr.vmem [resolvable:$true] %s30
      %33 = dma.hbm_to_vmem [thread:$0]  %s29, 128, %s31, [#allocation6]
    $region9: #{tpu_custom_call.1} parent=1 // pred_fallthru
      _
    // Predicated region
    $region10: #{tpu_custom_call.1} parent=1 // pred_check
      _
    $region11: #{tpu_custom_call.1} parent=1 // pred_check_branch
      %35 = sbr.rel (0) target = $region13
    $region12: #{tpu_custom_call.1} parent=1 // pred_region
      %37 = dma.done [#allocation3], 2048
    $region13: #{tpu_custom_call.1} parent=1 // pred_fallthru
      _
    // Predicated region
    $region14: #{tpu_custom_call.1} parent=1 // pred_check
      _
    $region15: #{tpu_custom_call.1} parent=1 // pred_check_branch
      %39 = sbr.rel (0) target = $region17
    $region16: #{tpu_custom_call.1} parent=1 // pred_region
      %41 = dma.done [#allocation6], 128
    $region17: #{tpu_custom_call.1} parent=1 // pred_fallthru
      _
    %v42 = vld [vmem:[#allocation5] sm:$0xff]
    %v43 = vld [vmem:[#allocation2] sm:$0xff]
    %v44 = vld [vmem:[#allocation2 + $0x8] sm:$0xff]
    %v45 = vld [vmem:[#allocation2 + $0x10] sm:$0xff]
    %v46 = vld [vmem:[#allocation2 + $0x18] sm:$0xff]
    %v47 = vld [vmem:[#allocation2 + $0x20] sm:$0xff]
    %v48 = vld [vmem:[#allocation2 + $0x28] sm:$0xff]
    %v49 = vld [vmem:[#allocation2 + $0x30] sm:$0xff]
    %v50 = vld [vmem:[#allocation2 + $0x38] sm:$0xff]
    %vm59 = vcmask 1040384
    %v60 = vrot.slane %v43, 7
    %v61 = vrot.slane %v44, 7
    %v62 = vsel %vm59, %v60, %v61
    %v63 = vrot.slane %v45, 7
    %v64 = vrot.slane %v46, 7
    %v65 = vsel %vm59, %v63, %v64
    %v66 = vrot.slane %v47, 7
    %v67 = vrot.slane %v48, 7
    %v68 = vsel %vm59, %v66, %v67
    %v69 = vrot.slane %v49, 7
    %v70 = vrot.slane %v50, 7
    %v71 = vsel %vm59, %v69, %v70
    %v80 = vsel %vm59, 0.0, %v60
    %v81 = vsel %vm59, 0.0, %v63
    %v82 = vsel %vm59, 0.0, %v66
    %v83 = vsel %vm59, 0.0, %v69
    %v84 = vsel %vm59, %v61, 0.0
    %v85 = vsel %vm59, %v64, 0.0
    %v86 = vsel %vm59, %v67, 0.0
    %v87 = vsel %vm59, %v70, 0.0
    %96 = vrot.lane.b32.xlu0 %v80, 1
    %v97 = vpop.permute.xlu0 %96
    %98 = vrot.lane.b32.xlu0 %v62, 1
    %v99 = vpop.permute.xlu0 %98
    %100 = vrot.lane.b32.xlu0 %v84, 1
    %v101 = vpop.permute.xlu0 %100
    %102 = vrot.lane.b32.xlu0 %v81, 1
    %v103 = vpop.permute.xlu0 %102
    %104 = vrot.lane.b32.xlu0 %v65, 1
    %v105 = vpop.permute.xlu0 %104
    %106 = vrot.lane.b32.xlu0 %v85, 1
    %v107 = vpop.permute.xlu0 %106
    %108 = vrot.lane.b32.xlu0 %v82, 1
    %v109 = vpop.permute.xlu0 %108
    %110 = vrot.lane.b32.xlu0 %v68, 1
    %v111 = vpop.permute.xlu0 %110
    %112 = vrot.lane.b32.xlu0 %v86, 1
    %v113 = vpop.permute.xlu0 %112
    %114 = vrot.lane.b32.xlu0 %v83, 1
    %v115 = vpop.permute.xlu0 %114
    %116 = vrot.lane.b32.xlu0 %v71, 1
    %v117 = vpop.permute.xlu0 %116
    %118 = vrot.lane.b32.xlu0 %v87, 1
    %v119 = vpop.permute.xlu0 %118
    %vm132 = vcmask 7168
    %v133 = vsel %vm132, 0.0, %v97
    %v134 = vsel %vm132, 0.0, %v99
    %v135 = vsel %vm132, 0.0, %v101
    %v136 = vsel %vm132, 0.0, %v103
    %v137 = vsel %vm132, 0.0, %v105
    %v138 = vsel %vm132, 0.0, %v107
    %v139 = vsel %vm132, 0.0, %v109
    %v140 = vsel %vm132, 0.0, %v111
    %v141 = vsel %vm132, 0.0, %v113
    %v142 = vsel %vm132, 0.0, %v115
    %v143 = vsel %vm132, 0.0, %v117
    %v144 = vsel %vm132, 0.0, %v119
    %vm145 = vcmask 138240
    %v146 = vsel %vm145, %v133, 0.0
    %v147 = vsel %vm145, %v134, 0.0
    %v148 = vsel %vm145, %v135, 0.0
    %v149 = vsel %vm145, %v136, 0.0
    %v150 = vsel %vm145, %v137, 0.0
    %v151 = vsel %vm145, %v138, 0.0
    %v152 = vsel %vm145, %v139, 0.0
    %v153 = vsel %vm145, %v140, 0.0
    %v154 = vsel %vm145, %v141, 0.0
    %v155 = vsel %vm145, %v142, 0.0
    %v156 = vsel %vm145, %v143, 0.0
    %v157 = vsel %vm145, %v144, 0.0
    %v158 = vrot.slane %v152, 4
    %vm159 = vcmask 1047556
    %v160 = vsel %vm159, %v158, %v146
    %v161 = vrot.slane %v146, 4
    %v162 = vsel %vm159, %v152, %v161
    %v164 = vunpack.c.l.s4 1983009808
    %v165 = vunpack.c.0.s8 %v164
    %v166 = vperm.slane %v160, %v165
    %v168 = vunpack.c.l.s4 1983009808
    %v169 = vunpack.c.0.s8 %v168
    %v170 = vperm.slane %v162, %v169
    %v171 = vrot.slane %v155, 4
    %v172 = vsel %vm159, %v171, %v149
    %v173 = vrot.slane %v149, 4
    %v174 = vsel %vm159, %v155, %v173
    %v176 = vunpack.c.l.s4 1983009808
    %v177 = vunpack.c.0.s8 %v176
    %v178 = vperm.slane %v172, %v177
    %v180 = vunpack.c.l.s4 1983009808
    %v181 = vunpack.c.0.s8 %v180
    %v182 = vperm.slane %v174, %v181
    %v183 = vrot.slane %v178, 4
    %v184 = vsel %vm159, %v183, %v166
    %v185 = vrot.slane %v166, 4
    %v186 = vsel %vm159, %v178, %v185
    %v188 = vunpack.c.l.s4 1934713408
    %v189 = vunpack.c.0.s8 %v188
    %v190 = vperm.slane %v184, %v189
    %v192 = vunpack.c.l.s4 1934713408
    %v193 = vunpack.c.0.s8 %v192
    %v194 = vperm.slane %v186, %v193
    %v195 = vrot.slane %v182, 4
    %v196 = vsel %vm159, %v195, %v170
    %v197 = vrot.slane %v170, 4
    %v198 = vsel %vm159, %v182, %v197
    %v200 = vunpack.c.l.s4 1934713408
    %v201 = vunpack.c.0.s8 %v200
    %v202 = vperm.slane %v196, %v201
    %v204 = vunpack.c.l.s4 1934713408
    %v205 = vunpack.c.0.s8 %v204
    %v206 = vperm.slane %v198, %v205
    %v207 = vrot.slane %v190, 4
    %v208 = vsel %vm159, 0.0, %v207
    %v209 = vrot.slane %v194, 4
    %v210 = vsel %vm159, 0.0, %v209
    %v211 = vrot.slane %v202, 4
    %v212 = vsel %vm159, 0.0, %v211
    %v213 = vrot.slane %v206, 4
    %v214 = vsel %vm159, 0.0, %v213
    %v215 = vrot.slane %v153, 4
    %v216 = vsel %vm159, %v215, %v147
    %v217 = vrot.slane %v147, 4
    %v218 = vsel %vm159, %v153, %v217
    %v220 = vunpack.c.l.s4 1983009808
    %v221 = vunpack.c.0.s8 %v220
    %v222 = vperm.slane %v216, %v221
    %v224 = vunpack.c.l.s4 1983009808
    %v225 = vunpack.c.0.s8 %v224
    %v226 = vperm.slane %v218, %v225
    %v227 = vrot.slane %v156, 4
    %v228 = vsel %vm159, %v227, %v150
    %v229 = vrot.slane %v150, 4
    %v230 = vsel %vm159, %v156, %v229
    %v232 = vunpack.c.l.s4 1983009808
    %v233 = vunpack.c.0.s8 %v232
    %v234 = vperm.slane %v228, %v233
    %v236 = vunpack.c.l.s4 1983009808
    %v237 = vunpack.c.0.s8 %v236
    %v238 = vperm.slane %v230, %v237
    %v239 = vrot.slane %v234, 4
    %v240 = vsel %vm159, %v239, %v222
    %v241 = vrot.slane %v222, 4
    %v242 = vsel %vm159, %v234, %v241
    %v244 = vunpack.c.l.s4 1934713408
    %v245 = vunpack.c.0.s8 %v244
    %v246 = vperm.slane %v240, %v245
    %v248 = vunpack.c.l.s4 1934713408
    %v249 = vunpack.c.0.s8 %v248
    %v250 = vperm.slane %v242, %v249
    %v251 = vrot.slane %v238, 4
    %v252 = vsel %vm159, %v251, %v226
    %v253 = vrot.slane %v226, 4
    %v254 = vsel %vm159, %v238, %v253
    %v256 = vunpack.c.l.s4 1934713408
    %v257 = vunpack.c.0.s8 %v256
    %v258 = vperm.slane %v252, %v257
    %v260 = vunpack.c.l.s4 1934713408
    %v261 = vunpack.c.0.s8 %v260
    %v262 = vperm.slane %v254, %v261
    %v263 = vrot.slane %v246, 4
    %v264 = vsel %vm159, 0.0, %v263
    %v265 = vrot.slane %v250, 4
    %v266 = vsel %vm159, 0.0, %v265
    %v267 = vrot.slane %v258, 4
    %v268 = vsel %vm159, 0.0, %v267
    %v269 = vrot.slane %v262, 4
    %v270 = vsel %vm159, 0.0, %v269
    %v271 = vrot.slane %v154, 4
    %v272 = vsel %vm159, %v271, %v148
    %v274 = vunpack.c.l.s4 1983009808
    %v275 = vunpack.c.0.s8 %v274
    %v276 = vperm.slane %v272, %v275
    %v277 = vrot.slane %v157, 4
    %v278 = vsel %vm159, %v277, %v151
    %v280 = vunpack.c.l.s4 1983009808
    %v281 = vunpack.c.0.s8 %v280
    %v282 = vperm.slane %v278, %v281
    %v283 = vrot.slane %v282, 4
    %v284 = vsel %vm159, %v283, %v276
    %v285 = vrot.slane %v276, 4
    %v286 = vsel %vm159, %v282, %v285
    %v288 = vunpack.c.l.s4 1934713408
    %v289 = vunpack.c.0.s8 %v288
    %v290 = vperm.slane %v284, %v289
    %v291 = vrot.slane %v290, 4
    %v292 = vsel %vm159, 0.0, %v291
    %v294 = vunpack.c.l.s4 1934713408
    %v295 = vunpack.c.0.s8 %v294
    %v296 = vperm.slane %v286, %v295
    %298 = vrot.lane.b32.xlu0 %v208, 18
    %v299 = vpop.permute.xlu0 %298
    %302 = vrot.lane.b32.xlu0 %v194, 36
    %v303 = vpop.permute.xlu0 %302
    %306 = vrot.lane.b32.xlu0 %v210, 54
    %v307 = vpop.permute.xlu0 %306
    %310 = vrot.lane.b32.xlu0 %v202, 72
    %v311 = vpop.permute.xlu0 %310
    %314 = vrot.lane.b32.xlu0 %v212, 90
    %v315 = vpop.permute.xlu0 %314
    %318 = vrot.lane.b32.xlu0 %v206, 108
    %v319 = vpop.permute.xlu0 %318
    %322 = vrot.lane.b32.xlu0 %v214, 126
    %v323 = vpop.permute.xlu0 %322
    %326 = vrot.lane.b32.xlu0 %v246, 16
    %v327 = vpop.permute.xlu0 %326
    %330 = vrot.lane.b32.xlu0 %v264, 34
    %v331 = vpop.permute.xlu0 %330
    %334 = vrot.lane.b32.xlu0 %v250, 52
    %v335 = vpop.permute.xlu0 %334
    %338 = vrot.lane.b32.xlu0 %v266, 70
    %v339 = vpop.permute.xlu0 %338
    %342 = vrot.lane.b32.xlu0 %v258, 88
    %v343 = vpop.permute.xlu0 %342
    %346 = vrot.lane.b32.xlu0 %v268, 106
    %v347 = vpop.permute.xlu0 %346
    %350 = vrot.lane.b32.xlu0 %v262, 124
    %v351 = vpop.permute.xlu0 %350
    %354 = vrot.lane.b32.xlu0 %v270, 14
    %v355 = vpop.permute.xlu0 %354
    %358 = vrot.lane.b32.xlu0 %v290, 32
    %v359 = vpop.permute.xlu0 %358
    %362 = vrot.lane.b32.xlu0 %v292, 50
    %v363 = vpop.permute.xlu0 %362
    %366 = vrot.lane.b32.xlu0 %v296, 68
    %v367 = vpop.permute.xlu0 %366
    %vm369 = vcmask 146432
    %v370 = vsel %vm369, %v190, %v299
    %vm371 = vcmask 293888
    %v372 = vsel %vm371, %v370, %v303
    %vm373 = vcmask 441344
    %v374 = vsel %vm373, %v372, %v307
    %vm375 = vcmask 588800
    %v376 = vsel %vm375, %v374, %v311
    %vm377 = vcmask 736256
    %v378 = vsel %vm377, %v376, %v315
    %vm379 = vcmask 883712
    %v380 = vsel %vm379, %v378, %v319
    %vm381 = vcmask 1031168
    %v382 = vsel %vm381, %v380, %v323
    %vm383 = vcmask 130048
    %v384 = vsel %vm383, %v323, %v327
    %vm385 = vcmask 277504
    %v386 = vsel %vm385, %v384, %v331
    %vm387 = vcmask 424960
    %v388 = vsel %vm387, %v386, %v335
    %vm389 = vcmask 572416
    %v390 = vsel %vm389, %v388, %v339
    %vm391 = vcmask 719872
    %v392 = vsel %vm391, %v390, %v343
    %vm393 = vcmask 867328
    %v394 = vsel %vm393, %v392, %v347
    %vm395 = vcmask 1014784
    %v396 = vsel %vm395, %v394, %v351
    %vm397 = vcmask 113664
    %v398 = vsel %vm397, %v351, %v355
    %vm399 = vcmask 261120
    %v400 = vsel %vm399, %v398, %v359
    %vm401 = vcmask 408576
    %v402 = vsel %vm401, %v400, %v363
    %vm403 = vcmask 556032
    %v404 = vsel %vm403, %v402, %v367
    %v408 = vrot.slane %v382, 4
    %v409 = vrot.slane %v396, 4
    %v410 = vrot.slane %v404, 4
    %411 = vrot.lane.b32.xlu0 %v408, 127
    %v412 = vpop.permute.xlu0 %411
    %413 = vrot.lane.b32.xlu0 %v409, 127
    %v414 = vpop.permute.xlu0 %413
    %415 = vrot.lane.b32.xlu0 %v410, 127
    %v416 = vpop.permute.xlu0 %415
    %vm417 = vcmask 1039360
    %v418 = vsel %vm417, %v412, %v414
    %v419 = vsel %vm417, %v414, %v416
    %423 = vrot.lane.b32.xlu0 %v382, 126
    %v424 = vpop.permute.xlu0 %423
    %425 = vrot.lane.b32.xlu0 %v396, 126
    %v426 = vpop.permute.xlu0 %425
    %427 = vrot.lane.b32.xlu0 %v404, 126
    %v428 = vpop.permute.xlu0 %427
    %v429 = vsel %vm381, %v424, %v426
    %v430 = vsel %vm381, %v426, %v428
    %434 = vrot.lane.b32.xlu0 %v408, 110
    %v435 = vpop.permute.xlu0 %434
    %436 = vrot.lane.b32.xlu0 %v409, 110
    %v437 = vpop.permute.xlu0 %436
    %438 = vrot.lane.b32.xlu0 %v410, 110
    %v439 = vpop.permute.xlu0 %438
    %vm440 = vcmask 900096
    %v441 = vsel %vm440, %v435, %v437
    %v442 = vsel %vm440, %v437, %v439
    %446 = vrot.lane.b32.xlu0 %v382, 109
    %v447 = vpop.permute.xlu0 %446
    %448 = vrot.lane.b32.xlu0 %v396, 109
    %v449 = vpop.permute.xlu0 %448
    %450 = vrot.lane.b32.xlu0 %v404, 109
    %v451 = vpop.permute.xlu0 %450
    %vm452 = vcmask 891904
    %v453 = vsel %vm452, %v447, %v449
    %v454 = vsel %vm452, %v449, %v451
    %458 = vrot.lane.b32.xlu0 %v408, 108
    %v459 = vpop.permute.xlu0 %458
    %460 = vrot.lane.b32.xlu0 %v409, 108
    %v461 = vpop.permute.xlu0 %460
    %462 = vrot.lane.b32.xlu0 %v410, 108
    %v463 = vpop.permute.xlu0 %462
    %v464 = vsel %vm379, %v459, %v461
    %v465 = vsel %vm379, %v461, %v463
    %469 = vrot.lane.b32.xlu0 %v382, 92
    %v470 = vpop.permute.xlu0 %469
    %471 = vrot.lane.b32.xlu0 %v396, 92
    %v472 = vpop.permute.xlu0 %471
    %473 = vrot.lane.b32.xlu0 %v404, 92
    %v474 = vpop.permute.xlu0 %473
    %vm475 = vcmask 752640
    %v476 = vsel %vm475, %v470, %v472
    %v477 = vsel %vm475, %v472, %v474
    %481 = vrot.lane.b32.xlu0 %v408, 91
    %v482 = vpop.permute.xlu0 %481
    %483 = vrot.lane.b32.xlu0 %v409, 91
    %v484 = vpop.permute.xlu0 %483
    %485 = vrot.lane.b32.xlu0 %v410, 91
    %v486 = vpop.permute.xlu0 %485
    %vm487 = vcmask 744448
    %v488 = vsel %vm487, %v482, %v484
    %v489 = vsel %vm487, %v484, %v486
    %493 = vrot.lane.b32.xlu0 %v382, 90
    %v494 = vpop.permute.xlu0 %493
    %495 = vrot.lane.b32.xlu0 %v396, 90
    %v496 = vpop.permute.xlu0 %495
    %497 = vrot.lane.b32.xlu0 %v404, 90
    %v498 = vpop.permute.xlu0 %497
    %v499 = vsel %vm377, %v494, %v496
    %v500 = vsel %vm377, %v496, %v498
    %vm501 = vcmask 1043456
    %v502 = vsel %vm501, %v382, %v418
    %v503 = vsel %vm501, %v396, %v419
    %v504 = vsel %vm501, %v404, %v416
    %v505 = vsel %vm501, %v429, %v441
    %v506 = vsel %vm501, %v430, %v442
    %v507 = vsel %vm501, %v428, %v439
    %v508 = vsel %vm501, %v453, %v464
    %v509 = vsel %vm501, %v454, %v465
    %v510 = vsel %vm501, %v451, %v463
    %v511 = vsel %vm501, %v476, %v488
    %v512 = vsel %vm501, %v477, %v489
    %v513 = vsel %vm501, %v474, %v486
    %v515 = vsel %vm371, %v42, 0
    %v517 = vsel %vm501, %v499, 0
    %v519 = vsel %vm501, %v500, 0
    %v521 = vsel %vm501, %v498, 0
    %523 = vmatpush.msra.mxu0 0.0
    %524 = vmatpush.msra.mxu0 0.0
    %525 = vmatpush.msra.mxu0 0.0
    %526 = vmatpush.msra.mxu0 0.0
    %527 = vmatpush.msra.mxu0 0.0
    %528 = vmatpush.msra.mxu0 0.0
    %529 = vmatpush.msra.mxu0 0.0
    %530 = vmatpush.msra.mxu0 0.0
    %531 = vmatpush.msra.mxu0 0.0
    %532 = vmatpush.msra.mxu0 0.0
    %533 = vmatpush.msra.mxu0 0.0
    %534 = vmatpush.msra.mxu0 %v517
    %535 = vmatpush.msra.mxu0 %v511
    %536 = vmatpush.msra.mxu0 %v508
    %537 = vmatpush.msra.mxu0 %v505
    %538 = vmatpush.msra.mxu0 %v502
    %539 = vmatmul.f32.gmra.mxu0 %v515
    %v540 = vpop.f32.mrf.mxu0
    %v541 = vadd.f32 0.0, %v540
    %542 = vdwg.mxu0
    %543 = vmatpush.msra.mxu0 0.0
    %544 = vmatpush.msra.mxu0 0.0
    %545 = vmatpush.msra.mxu0 0.0
    %546 = vmatpush.msra.mxu0 0.0
    %547 = vmatpush.msra.mxu0 0.0
    %548 = vmatpush.msra.mxu0 0.0
    %549 = vmatpush.msra.mxu0 0.0
    %550 = vmatpush.msra.mxu0 0.0
    %551 = vmatpush.msra.mxu0 0.0
    %552 = vmatpush.msra.mxu0 0.0
    %553 = vmatpush.msra.mxu0 0.0
    %554 = vmatpush.msra.mxu0 %v519
    %555 = vmatpush.msra.mxu0 %v512
    %556 = vmatpush.msra.mxu0 %v509
    %557 = vmatpush.msra.mxu0 %v506
    %558 = vmatpush.msra.mxu0 %v503
    %559 = vmatmul.f32.gmra.mxu0 %v515
    %v560 = vpop.f32.mrf.mxu0
    %v561 = vadd.f32 0.0, %v560
    %562 = vdwg.mxu0
    %563 = vmatpush.msra.mxu0 0.0
    %564 = vmatpush.msra.mxu0 0.0
    %565 = vmatpush.msra.mxu0 0.0
    %566 = vmatpush.msra.mxu0 0.0
    %567 = vmatpush.msra.mxu0 0.0
    %568 = vmatpush.msra.mxu0 0.0
    %569 = vmatpush.msra.mxu0 0.0
    %570 = vmatpush.msra.mxu0 0.0
    %571 = vmatpush.msra.mxu0 0.0
    %572 = vmatpush.msra.mxu0 0.0
    %573 = vmatpush.msra.mxu0 0.0
    %574 = vmatpush.msra.mxu0 %v521
    %575 = vmatpush.msra.mxu0 %v513
    %576 = vmatpush.msra.mxu0 %v510
    %577 = vmatpush.msra.mxu0 %v507
    %578 = vmatpush.msra.mxu0 %v504
    %579 = vmatmul.f32.gmra.mxu0 %v515
    %v580 = vpop.f32.mrf.mxu0
    %v581 = vadd.f32 0.0, %v580
    %582 = vdwg.mxu0
    %584 = vrot.lane.b32.xlu0 %v541, 110
    %v585 = vpop.permute.xlu0 %584
    %587 = vrot.lane.b32.xlu0 %v541, 92
    %v588 = vpop.permute.xlu0 %587
    %590 = vrot.lane.b32.xlu0 %v541, 74
    %v591 = vpop.permute.xlu0 %590
    %593 = vrot.lane.b32.xlu0 %v541, 56
    %v594 = vpop.permute.xlu0 %593
    %596 = vrot.lane.b32.xlu0 %v541, 38
    %v597 = vpop.permute.xlu0 %596
    %599 = vrot.lane.b32.xlu0 %v541, 20
    %v600 = vpop.permute.xlu0 %599
    %603 = vrot.lane.b32.xlu0 %v541, 2
    %v604 = vpop.permute.xlu0 %603
    %605 = vrot.lane.b32.xlu0 %v561, 2
    %v606 = vpop.permute.xlu0 %605
    %vm607 = vcmask 15360
    %v608 = vsel %vm607, %v604, %v606
    %610 = vrot.lane.b32.xlu0 %v561, 112
    %v611 = vpop.permute.xlu0 %610
    %613 = vrot.lane.b32.xlu0 %v561, 94
    %v614 = vpop.permute.xlu0 %613
    %616 = vrot.lane.b32.xlu0 %v561, 76
    %v617 = vpop.permute.xlu0 %616
    %619 = vrot.lane.b32.xlu0 %v561, 58
    %v620 = vpop.permute.xlu0 %619
    %622 = vrot.lane.b32.xlu0 %v561, 40
    %v623 = vpop.permute.xlu0 %622
    %625 = vrot.lane.b32.xlu0 %v561, 22
    %v626 = vpop.permute.xlu0 %625
    %629 = vrot.lane.b32.xlu0 %v561, 4
    %v630 = vpop.permute.xlu0 %629
    %631 = vrot.lane.b32.xlu0 %v581, 4
    %v632 = vpop.permute.xlu0 %631
    %vm633 = vcmask 31744
    %v634 = vsel %vm633, %v630, %v632
    %636 = vrot.lane.b32.xlu0 %v581, 114
    %v637 = vpop.permute.xlu0 %636
    %v639 = vrot.slane %v588, 4
    %v640 = vsel %vm159, %v639, %v541
    %v641 = vrot.slane %v541, 4
    %v642 = vsel %vm159, %v588, %v641
    %v644 = vunpack.c.l.s4 1983009808
    %v645 = vunpack.c.0.s8 %v644
    %v646 = vperm.slane %v640, %v645
    %v648 = vunpack.c.l.s4 1983009808
    %v649 = vunpack.c.0.s8 %v648
    %v650 = vperm.slane %v642, %v649
    %v651 = vrot.slane %v591, 4
    %v652 = vsel %vm159, %v651, %v585
    %v653 = vrot.slane %v585, 4
    %v654 = vsel %vm159, %v591, %v653
    %v656 = vunpack.c.l.s4 1983009808
    %v657 = vunpack.c.0.s8 %v656
    %v658 = vperm.slane %v652, %v657
    %v660 = vunpack.c.l.s4 1983009808
    %v661 = vunpack.c.0.s8 %v660
    %v662 = vperm.slane %v654, %v661
    %v663 = vrot.slane %v600, 4
    %v664 = vsel %vm159, %v663, %v594
    %v665 = vrot.slane %v594, 4
    %v666 = vsel %vm159, %v600, %v665
    %v668 = vunpack.c.l.s4 1983009808
    %v669 = vunpack.c.0.s8 %v668
    %v670 = vperm.slane %v664, %v669
    %v672 = vunpack.c.l.s4 1983009808
    %v673 = vunpack.c.0.s8 %v672
    %v674 = vperm.slane %v666, %v673
    %v675 = vrot.slane %v608, 4
    %v676 = vsel %vm159, %v675, %v597
    %v677 = vrot.slane %v597, 4
    %v678 = vsel %vm159, %v608, %v677
    %v680 = vunpack.c.l.s4 1983009808
    %v681 = vunpack.c.0.s8 %v680
    %v682 = vperm.slane %v676, %v681
    %v684 = vunpack.c.l.s4 1983009808
    %v685 = vunpack.c.0.s8 %v684
    %v686 = vperm.slane %v678, %v685
    %v687 = vrot.slane %v658, 4
    %v688 = vsel %vm159, %v687, %v646
    %v689 = vrot.slane %v646, 4
    %v690 = vsel %vm159, %v658, %v689
    %v692 = vunpack.c.l.s4 1934713408
    %v693 = vunpack.c.0.s8 %v692
    %v694 = vperm.slane %v688, %v693
    %v696 = vunpack.c.l.s4 1934713408
    %v697 = vunpack.c.0.s8 %v696
    %v698 = vperm.slane %v690, %v697
    %v699 = vrot.slane %v662, 4
    %v700 = vsel %vm159, %v699, %v650
    %v701 = vrot.slane %v650, 4
    %v702 = vsel %vm159, %v662, %v701
    %v704 = vunpack.c.l.s4 1934713408
    %v705 = vunpack.c.0.s8 %v704
    %v706 = vperm.slane %v700, %v705
    %v708 = vunpack.c.l.s4 1934713408
    %v709 = vunpack.c.0.s8 %v708
    %v710 = vperm.slane %v702, %v709
    %v711 = vrot.slane %v682, 4
    %v712 = vsel %vm159, %v711, %v670
    %v713 = vrot.slane %v670, 4
    %v714 = vsel %vm159, %v682, %v713
    %v716 = vunpack.c.l.s4 1934713408
    %v717 = vunpack.c.0.s8 %v716
    %v718 = vperm.slane %v712, %v717
    %v720 = vunpack.c.l.s4 1934713408
    %v721 = vunpack.c.0.s8 %v720
    %v722 = vperm.slane %v714, %v721
    %v723 = vrot.slane %v686, 4
    %v724 = vsel %vm159, %v723, %v674
    %v725 = vrot.slane %v674, 4
    %v726 = vsel %vm159, %v686, %v725
    %v728 = vunpack.c.l.s4 1934713408
    %v729 = vunpack.c.0.s8 %v728
    %v730 = vperm.slane %v724, %v729
    %v732 = vunpack.c.l.s4 1934713408
    %v733 = vunpack.c.0.s8 %v732
    %v734 = vperm.slane %v726, %v733
    %v735 = vrot.slane %v718, 4
    %v736 = vsel %vm159, %v735, %v694
    %v737 = vrot.slane %v694, 4
    %v738 = vsel %vm159, %v718, %v737
    %v739 = vrot.slane %v722, 4
    %v740 = vsel %vm159, %v739, %v698
    %v741 = vrot.slane %v698, 4
    %v742 = vsel %vm159, %v722, %v741
    %v743 = vrot.slane %v730, 4
    %v744 = vsel %vm159, %v743, %v706
    %v745 = vrot.slane %v706, 4
    %v746 = vsel %vm159, %v730, %v745
    %v747 = vrot.slane %v734, 4
    %v748 = vsel %vm159, %v747, %v710
    %v749 = vrot.slane %v710, 4
    %v750 = vsel %vm159, %v734, %v749
    %v751 = vrot.slane %v617, 4
    %v752 = vsel %vm159, %v751, %v611
    %v753 = vrot.slane %v611, 4
    %v754 = vsel %vm159, %v617, %v753
    %v756 = vunpack.c.l.s4 1983009808
    %v757 = vunpack.c.0.s8 %v756
    %v758 = vperm.slane %v752, %v757
    %v760 = vunpack.c.l.s4 1983009808
    %v761 = vunpack.c.0.s8 %v760
    %v762 = vperm.slane %v754, %v761
    %v763 = vrot.slane %v620, 4
    %v764 = vsel %vm159, %v763, %v614
    %v765 = vrot.slane %v614, 4
    %v766 = vsel %vm159, %v620, %v765
    %v768 = vunpack.c.l.s4 1983009808
    %v769 = vunpack.c.0.s8 %v768
    %v770 = vperm.slane %v764, %v769
    %v772 = vunpack.c.l.s4 1983009808
    %v773 = vunpack.c.0.s8 %v772
    %v774 = vperm.slane %v766, %v773
    %v775 = vrot.slane %v634, 4
    %v776 = vsel %vm159, %v775, %v623
    %v777 = vrot.slane %v623, 4
    %v778 = vsel %vm159, %v634, %v777
    %v780 = vunpack.c.l.s4 1983009808
    %v781 = vunpack.c.0.s8 %v780
    %v782 = vperm.slane %v776, %v781
    %v784 = vunpack.c.l.s4 1983009808
    %v785 = vunpack.c.0.s8 %v784
    %v786 = vperm.slane %v778, %v785
    %v787 = vrot.slane %v637, 4
    %v788 = vsel %vm159, %v787, %v626
    %v789 = vrot.slane %v626, 4
    %v790 = vsel %vm159, %v637, %v789
    %v792 = vunpack.c.l.s4 1983009808
    %v793 = vunpack.c.0.s8 %v792
    %v794 = vperm.slane %v788, %v793
    %v796 = vunpack.c.l.s4 1983009808
    %v797 = vunpack.c.0.s8 %v796
    %v798 = vperm.slane %v790, %v797
    %v799 = vrot.slane %v770, 4
    %v800 = vsel %vm159, %v799, %v758
    %v801 = vrot.slane %v758, 4
    %v802 = vsel %vm159, %v770, %v801
    %v804 = vunpack.c.l.s4 1934713408
    %v805 = vunpack.c.0.s8 %v804
    %v806 = vperm.slane %v800, %v805
    %v808 = vunpack.c.l.s4 1934713408
    %v809 = vunpack.c.0.s8 %v808
    %v810 = vperm.slane %v802, %v809
    %v811 = vrot.slane %v774, 4
    %v812 = vsel %vm159, %v811, %v762
    %v813 = vrot.slane %v762, 4
    %v814 = vsel %vm159, %v774, %v813
    %v816 = vunpack.c.l.s4 1934713408
    %v817 = vunpack.c.0.s8 %v816
    %v818 = vperm.slane %v812, %v817
    %v820 = vunpack.c.l.s4 1934713408
    %v821 = vunpack.c.0.s8 %v820
    %v822 = vperm.slane %v814, %v821
    %v823 = vrot.slane %v794, 4
    %v824 = vsel %vm159, %v823, %v782
    %v825 = vrot.slane %v782, 4
    %v826 = vsel %vm159, %v794, %v825
    %v828 = vunpack.c.l.s4 1934713408
    %v829 = vunpack.c.0.s8 %v828
    %v830 = vperm.slane %v824, %v829
    %v832 = vunpack.c.l.s4 1934713408
    %v833 = vunpack.c.0.s8 %v832
    %v834 = vperm.slane %v826, %v833
    %v835 = vrot.slane %v798, 4
    %v836 = vsel %vm159, %v835, %v786
    %v837 = vrot.slane %v786, 4
    %v838 = vsel %vm159, %v798, %v837
    %v840 = vunpack.c.l.s4 1934713408
    %v841 = vunpack.c.0.s8 %v840
    %v842 = vperm.slane %v836, %v841
    %v844 = vunpack.c.l.s4 1934713408
    %v845 = vunpack.c.0.s8 %v844
    %v846 = vperm.slane %v838, %v845
    %v847 = vrot.slane %v830, 4
    %v848 = vsel %vm159, %v847, %v806
    %v849 = vrot.slane %v806, 4
    %v850 = vsel %vm159, %v830, %v849
    %v851 = vrot.slane %v834, 4
    %v852 = vsel %vm159, %v851, %v810
    %v853 = vrot.slane %v810, 4
    %v854 = vsel %vm159, %v834, %v853
    %v855 = vrot.slane %v842, 4
    %v856 = vsel %vm159, %v855, %v818
    %v857 = vrot.slane %v818, 4
    %v858 = vsel %vm159, %v842, %v857
    %v859 = vrot.slane %v846, 4
    %v860 = vsel %vm159, %v859, %v822
    %v861 = vrot.slane %v822, 4
    %v862 = vsel %vm159, %v846, %v861
    %v863 = vrot.slane %v740, 4
    %v864 = vsel %vm159, %v863, %v736
    %v865 = vrot.slane %v736, 4
    %v866 = vsel %vm159, %v740, %v865
    %v868 = vunpack.c.l.s4 1983009808
    %v869 = vunpack.c.0.s8 %v868
    %v870 = vperm.slane %v864, %v869
    %v872 = vunpack.c.l.s4 1983009808
    %v873 = vunpack.c.0.s8 %v872
    %v874 = vperm.slane %v866, %v873
    %v875 = vrot.slane %v742, 4
    %v876 = vsel %vm159, %v875, %v738
    %v877 = vrot.slane %v738, 4
    %v878 = vsel %vm159, %v742, %v877
    %v880 = vunpack.c.l.s4 1983009808
    %v881 = vunpack.c.0.s8 %v880
    %v882 = vperm.slane %v876, %v881
    %v884 = vunpack.c.l.s4 1983009808
    %v885 = vunpack.c.0.s8 %v884
    %v886 = vperm.slane %v878, %v885
    %v887 = vrot.slane %v748, 4
    %v888 = vsel %vm159, %v887, %v744
    %v889 = vrot.slane %v744, 4
    %v890 = vsel %vm159, %v748, %v889
    %v892 = vunpack.c.l.s4 1983009808
    %v893 = vunpack.c.0.s8 %v892
    %v894 = vperm.slane %v888, %v893
    %v896 = vunpack.c.l.s4 1983009808
    %v897 = vunpack.c.0.s8 %v896
    %v898 = vperm.slane %v890, %v897
    %v899 = vrot.slane %v750, 4
    %v900 = vsel %vm159, %v899, %v746
    %v901 = vrot.slane %v746, 4
    %v902 = vsel %vm159, %v750, %v901
    %v904 = vunpack.c.l.s4 1983009808
    %v905 = vunpack.c.0.s8 %v904
    %v906 = vperm.slane %v900, %v905
    %v908 = vunpack.c.l.s4 1983009808
    %v909 = vunpack.c.0.s8 %v908
    %v910 = vperm.slane %v902, %v909
    %v911 = vrot.slane %v882, 4
    %v912 = vsel %vm159, %v911, %v870
    %v913 = vrot.slane %v870, 4
    %v914 = vsel %vm159, %v882, %v913
    %v916 = vunpack.c.l.s4 1934713408
    %v917 = vunpack.c.0.s8 %v916
    %v918 = vperm.slane %v912, %v917
    %v920 = vunpack.c.l.s4 1934713408
    %v921 = vunpack.c.0.s8 %v920
    %v922 = vperm.slane %v914, %v921
    %v923 = vrot.slane %v886, 4
    %v924 = vsel %vm159, %v923, %v874
    %v925 = vrot.slane %v874, 4
    %v926 = vsel %vm159, %v886, %v925
    %v928 = vunpack.c.l.s4 1934713408
    %v929 = vunpack.c.0.s8 %v928
    %v930 = vperm.slane %v924, %v929
    %v932 = vunpack.c.l.s4 1934713408
    %v933 = vunpack.c.0.s8 %v932
    %v934 = vperm.slane %v926, %v933
    %v935 = vrot.slane %v906, 4
    %v936 = vsel %vm159, %v935, %v894
    %v937 = vrot.slane %v894, 4
    %v938 = vsel %vm159, %v906, %v937
    %v940 = vunpack.c.l.s4 1934713408
    %v941 = vunpack.c.0.s8 %v940
    %v942 = vperm.slane %v936, %v941
    %v944 = vunpack.c.l.s4 1934713408
    %v945 = vunpack.c.0.s8 %v944
    %v946 = vperm.slane %v938, %v945
    %v947 = vrot.slane %v910, 4
    %v948 = vsel %vm159, %v947, %v898
    %v949 = vrot.slane %v898, 4
    %v950 = vsel %vm159, %v910, %v949
    %v952 = vunpack.c.l.s4 1934713408
    %v953 = vunpack.c.0.s8 %v952
    %v954 = vperm.slane %v948, %v953
    %v956 = vunpack.c.l.s4 1934713408
    %v957 = vunpack.c.0.s8 %v956
    %v958 = vperm.slane %v950, %v957
    %v959 = vrot.slane %v942, 4
    %v960 = vsel %vm159, %v959, %v918
    %v961 = vrot.slane %v918, 4
    %v962 = vsel %vm159, %v942, %v961
    %v963 = vrot.slane %v946, 4
    %v964 = vsel %vm159, %v963, %v922
    %v965 = vrot.slane %v922, 4
    %v966 = vsel %vm159, %v946, %v965
    %v967 = vrot.slane %v954, 4
    %v968 = vsel %vm159, %v967, %v930
    %v969 = vrot.slane %v930, 4
    %v970 = vsel %vm159, %v954, %v969
    %v971 = vrot.slane %v958, 4
    %v972 = vsel %vm159, %v971, %v934
    %v973 = vrot.slane %v934, 4
    %v974 = vsel %vm159, %v958, %v973
    %v975 = vrot.slane %v852, 4
    %v976 = vsel %vm159, %v975, %v848
    %v977 = vrot.slane %v848, 4
    %v978 = vsel %vm159, %v852, %v977
    %v980 = vunpack.c.l.s4 1983009808
    %v981 = vunpack.c.0.s8 %v980
    %v982 = vperm.slane %v976, %v981
    %v984 = vunpack.c.l.s4 1983009808
    %v985 = vunpack.c.0.s8 %v984
    %v986 = vperm.slane %v978, %v985
    %v987 = vrot.slane %v854, 4
    %v988 = vsel %vm159, %v987, %v850
    %v989 = vrot.slane %v850, 4
    %v990 = vsel %vm159, %v854, %v989
    %v992 = vunpack.c.l.s4 1983009808
    %v993 = vunpack.c.0.s8 %v992
    %v994 = vperm.slane %v988, %v993
    %v996 = vunpack.c.l.s4 1983009808
    %v997 = vunpack.c.0.s8 %v996
    %v998 = vperm.slane %v990, %v997
    %v999 = vrot.slane %v860, 4
    %v1000 = vsel %vm159, %v999, %v856
    %v1001 = vrot.slane %v856, 4
    %v1002 = vsel %vm159, %v860, %v1001
    %v1004 = vunpack.c.l.s4 1983009808
    %v1005 = vunpack.c.0.s8 %v1004
    %v1006 = vperm.slane %v1000, %v1005
    %v1008 = vunpack.c.l.s4 1983009808
    %v1009 = vunpack.c.0.s8 %v1008
    %v1010 = vperm.slane %v1002, %v1009
    %v1011 = vrot.slane %v862, 4
    %v1012 = vsel %vm159, %v1011, %v858
    %v1013 = vrot.slane %v858, 4
    %v1014 = vsel %vm159, %v862, %v1013
    %v1016 = vunpack.c.l.s4 1983009808
    %v1017 = vunpack.c.0.s8 %v1016
    %v1018 = vperm.slane %v1012, %v1017
    %v1020 = vunpack.c.l.s4 1983009808
    %v1021 = vunpack.c.0.s8 %v1020
    %v1022 = vperm.slane %v1014, %v1021
    %v1023 = vrot.slane %v994, 4
    %v1024 = vsel %vm159, %v1023, %v982
    %v1025 = vrot.slane %v982, 4
    %v1026 = vsel %vm159, %v994, %v1025
    %v1028 = vunpack.c.l.s4 1934713408
    %v1029 = vunpack.c.0.s8 %v1028
    %v1030 = vperm.slane %v1024, %v1029
    %v1032 = vunpack.c.l.s4 1934713408
    %v1033 = vunpack.c.0.s8 %v1032
    %v1034 = vperm.slane %v1026, %v1033
    %v1035 = vrot.slane %v998, 4
    %v1036 = vsel %vm159, %v1035, %v986
    %v1037 = vrot.slane %v986, 4
    %v1038 = vsel %vm159, %v998, %v1037
    %v1040 = vunpack.c.l.s4 1934713408
    %v1041 = vunpack.c.0.s8 %v1040
    %v1042 = vperm.slane %v1036, %v1041
    %v1044 = vunpack.c.l.s4 1934713408
    %v1045 = vunpack.c.0.s8 %v1044
    %v1046 = vperm.slane %v1038, %v1045
    %v1047 = vrot.slane %v1018, 4
    %v1048 = vsel %vm159, %v1047, %v1006
    %v1049 = vrot.slane %v1006, 4
    %v1050 = vsel %vm159, %v1018, %v1049
    %v1052 = vunpack.c.l.s4 1934713408
    %v1053 = vunpack.c.0.s8 %v1052
    %v1054 = vperm.slane %v1048, %v1053
    %v1056 = vunpack.c.l.s4 1934713408
    %v1057 = vunpack.c.0.s8 %v1056
    %v1058 = vperm.slane %v1050, %v1057
    %v1059 = vrot.slane %v1022, 4
    %v1060 = vsel %vm159, %v1059, %v1010
    %v1061 = vrot.slane %v1010, 4
    %v1062 = vsel %vm159, %v1022, %v1061
    %v1064 = vunpack.c.l.s4 1934713408
    %v1065 = vunpack.c.0.s8 %v1064
    %v1066 = vperm.slane %v1060, %v1065
    %v1068 = vunpack.c.l.s4 1934713408
    %v1069 = vunpack.c.0.s8 %v1068
    %v1070 = vperm.slane %v1062, %v1069
    %v1071 = vrot.slane %v1054, 4
    %v1072 = vsel %vm159, %v1071, %v1030
    %v1073 = vrot.slane %v1030, 4
    %v1074 = vsel %vm159, %v1054, %v1073
    %v1075 = vrot.slane %v1058, 4
    %v1076 = vsel %vm159, %v1075, %v1034
    %v1077 = vrot.slane %v1034, 4
    %v1078 = vsel %vm159, %v1058, %v1077
    %v1079 = vrot.slane %v1066, 4
    %v1080 = vsel %vm159, %v1079, %v1042
    %v1081 = vrot.slane %v1042, 4
    %v1082 = vsel %vm159, %v1066, %v1081
    %v1083 = vrot.slane %v1070, 4
    %v1084 = vsel %vm159, %v1083, %v1046
    %v1085 = vrot.slane %v1046, 4
    %v1086 = vsel %vm159, %v1070, %v1085
    %1088 = vrot.lane.b32.xlu0 %v962, 16
    %v1089 = vpop.permute.xlu0 %1088
    %1092 = vrot.lane.b32.xlu0 %v964, 32
    %v1093 = vpop.permute.xlu0 %1092
    %1096 = vrot.lane.b32.xlu0 %v966, 48
    %v1097 = vpop.permute.xlu0 %1096
    %1100 = vrot.lane.b32.xlu0 %v968, 64
    %v1101 = vpop.permute.xlu0 %1100
    %1104 = vrot.lane.b32.xlu0 %v970, 80
    %v1105 = vpop.permute.xlu0 %1104
    %1108 = vrot.lane.b32.xlu0 %v972, 96
    %v1109 = vpop.permute.xlu0 %1108
    %1112 = vrot.lane.b32.xlu0 %v974, 112
    %v1113 = vpop.permute.xlu0 %1112
    %1116 = vrot.lane.b32.xlu0 %v1074, 16
    %v1117 = vpop.permute.xlu0 %1116
    %1120 = vrot.lane.b32.xlu0 %v1076, 32
    %v1121 = vpop.permute.xlu0 %1120
    %1124 = vrot.lane.b32.xlu0 %v1078, 48
    %v1125 = vpop.permute.xlu0 %1124
    %1128 = vrot.lane.b32.xlu0 %v1080, 64
    %v1129 = vpop.permute.xlu0 %1128
    %1132 = vrot.lane.b32.xlu0 %v1082, 80
    %v1133 = vpop.permute.xlu0 %1132
    %1136 = vrot.lane.b32.xlu0 %v1084, 96
    %v1137 = vpop.permute.xlu0 %1136
    %1140 = vrot.lane.b32.xlu0 %v1086, 112
    %v1141 = vpop.permute.xlu0 %1140
    %v1143 = vsel %vm383, %v960, %v1089
    %v1144 = vsel %vm399, %v1143, %v1093
    %vm1145 = vcmask 392192
    %v1146 = vsel %vm1145, %v1144, %v1097
    %vm1147 = vcmask 523264
    %v1148 = vsel %vm1147, %v1146, %v1101
    %vm1149 = vcmask 654336
    %v1150 = vsel %vm1149, %v1148, %v1105
    %vm1151 = vcmask 785408
    %v1152 = vsel %vm1151, %v1150, %v1109
    %vm1153 = vcmask 916480
    %v1154 = vsel %vm1153, %v1152, %v1113
    %v1155 = vsel %vm383, %v1072, %v1117
    %v1156 = vsel %vm399, %v1155, %v1121
    %v1157 = vsel %vm1145, %v1156, %v1125
    %v1158 = vsel %vm1147, %v1157, %v1129
    %v1159 = vsel %vm1149, %v1158, %v1133
    %v1160 = vsel %vm1151, %v1159, %v1137
    %v1161 = vsel %vm1153, %v1160, %v1141
    %v1162 = vadd.f32 %v1154, %v1161
    %1163 = vadd.xlane.f32.xlu0 %v1162
    %v1164 = vpop.xlane.xlu0 %1163
    %v1165 = vmul.f32 %v1164, 0.00390625
    %v1166 = vmul.f32 %v1154, %v1154
    %v1167 = vmul.f32 %v1161, %v1161
    %v1168 = vadd.f32 %v1166, %v1167
    %1169 = vadd.xlane.f32.xlu0 %v1168
    %v1170 = vpop.xlane.xlu0 %1169
    %v1171 = vmul.f32 %v1170, 0.00390625
    %v1172 = vmul.f32 %v1165, %v1165
    %v1173 = vsub.f32 %v1171, %v1172
    %v1174 = vsub.f32 %v1154, %v1165
    %v1175 = vsub.f32 %v1161, %v1165
    %v1176 = vadd.f32 %v1173, 1e-05
    %v1177 = vrsqrt.pop %v1176
    %v1178 = vmul.f32 %v1177, %v1176
    %v1179 = vmul.f32 %v1178, %v1177
    %v1180 = vmul.f32 0.5, %v1179
    %v1181 = vsub.f32 1.5, %v1180
    %v1182 = vmul.f32 %v1177, %v1181
    %vm1183 = vweird.f32 %v1176
    %vm1184 = vweird.f32 %v1177
    %vm1185 = vmor %vm1183, %vm1184
    %v1186 = vsel %vm1185, %v1177, %v1182
    %v1187 = vmul.f32 %v1174, %v1186
    %v1188 = vmul.f32 %v1175, %v1186
    %v1189 = vmax.f32 %v1187, 0.0
    %v1190 = vmax.f32 %v1188, 0.0
    %1191 = vst [vmem:[#allocation7] sm:$0xff] %v1189
    %1192 = vst [vmem:[#allocation7 + $0x8] sm:$0xff] %v1190
    %s1193 = scalar_lea.vmem [#allocation2], 64
    %v1194 = vld [vmem:[%s1193] sm:$0xff]
    %v1195 = vld [vmem:[%s1193 + $0x8] sm:$0xff]
    %v1196 = vld [vmem:[%s1193 + $0x10] sm:$0xff]
    %v1197 = vld [vmem:[%s1193 + $0x18] sm:$0xff]
    %v1198 = vld [vmem:[%s1193 + $0x20] sm:$0xff]
    %v1199 = vld [vmem:[%s1193 + $0x28] sm:$0xff]
    %v1200 = vld [vmem:[%s1193 + $0x30] sm:$0xff]
    %v1201 = vld [vmem:[%s1193 + $0x38] sm:$0xff]
    %v1210 = vrot.slane %v1194, 7
    %v1211 = vrot.slane %v1195, 7
    %v1212 = vsel %vm59, %v1210, %v1211
    %v1213 = vrot.slane %v1196, 7
    %v1214 = vrot.slane %v1197, 7
    %v1215 = vsel %vm59, %v1213, %v1214
    %v1216 = vrot.slane %v1198, 7
    %v1217 = vrot.slane %v1199, 7
    %v1218 = vsel %vm59, %v1216, %v1217
    %v1219 = vrot.slane %v1200, 7
    %v1220 = vrot.slane %v1201, 7
    %v1221 = vsel %vm59, %v1219, %v1220
    %v1230 = vsel %vm59, 0.0, %v1210
    %v1231 = vsel %vm59, 0.0, %v1213
    %v1232 = vsel %vm59, 0.0, %v1216
    %v1233 = vsel %vm59, 0.0, %v1219
    %v1234 = vsel %vm59, %v1211, 0.0
    %v1235 = vsel %vm59, %v1214, 0.0
    %v1236 = vsel %vm59, %v1217, 0.0
    %v1237 = vsel %vm59, %v1220, 0.0
    %1246 = vrot.lane.b32.xlu0 %v1230, 1
    %v1247 = vpop.permute.xlu0 %1246
    %1248 = vrot.lane.b32.xlu0 %v1212, 1
    %v1249 = vpop.permute.xlu0 %1248
    %1250 = vrot.lane.b32.xlu0 %v1234, 1
    %v1251 = vpop.permute.xlu0 %1250
    %1252 = vrot.lane.b32.xlu0 %v1231, 1
    %v1253 = vpop.permute.xlu0 %1252
    %1254 = vrot.lane.b32.xlu0 %v1215, 1
    %v1255 = vpop.permute.xlu0 %1254
    %1256 = vrot.lane.b32.xlu0 %v1235, 1
    %v1257 = vpop.permute.xlu0 %1256
    %1258 = vrot.lane.b32.xlu0 %v1232, 1
    %v1259 = vpop.permute.xlu0 %1258
    %1260 = vrot.lane.b32.xlu0 %v1218, 1
    %v1261 = vpop.permute.xlu0 %1260
    %1262 = vrot.lane.b32.xlu0 %v1236, 1
    %v1263 = vpop.permute.xlu0 %1262
    %1264 = vrot.lane.b32.xlu0 %v1233, 1
    %v1265 = vpop.permute.xlu0 %1264
    %1266 = vrot.lane.b32.xlu0 %v1221, 1
    %v1267 = vpop.permute.xlu0 %1266
    %1268 = vrot.lane.b32.xlu0 %v1237, 1
    %v1269 = vpop.permute.xlu0 %1268
    %v1282 = vsel %vm132, 0.0, %v1247
    %v1283 = vsel %vm132, 0.0, %v1249
    %v1284 = vsel %vm132, 0.0, %v1251
    %v1285 = vsel %vm132, 0.0, %v1253
    %v1286 = vsel %vm132, 0.0, %v1255
    %v1287 = vsel %vm132, 0.0, %v1257
    %v1288 = vsel %vm132, 0.0, %v1259
    %v1289 = vsel %vm132, 0.0, %v1261
    %v1290 = vsel %vm132, 0.0, %v1263
    %v1291 = vsel %vm132, 0.0, %v1265
    %v1292 = vsel %vm132, 0.0, %v1267
    %v1293 = vsel %vm132, 0.0, %v1269
    %v1294 = vsel %vm145, %v1282, 0.0
    %v1295 = vsel %vm145, %v1283, 0.0
    %v1296 = vsel %vm145, %v1284, 0.0
    %v1297 = vsel %vm145, %v1285, 0.0
    %v1298 = vsel %vm145, %v1286, 0.0
    %v1299 = vsel %vm145, %v1287, 0.0
    %v1300 = vsel %vm145, %v1288, 0.0
    %v1301 = vsel %vm145, %v1289, 0.0
    %v1302 = vsel %vm145, %v1290, 0.0
    %v1303 = vsel %vm145, %v1291, 0.0
    %v1304 = vsel %vm145, %v1292, 0.0
    %v1305 = vsel %vm145, %v1293, 0.0
    %v1306 = vrot.slane %v1300, 4
    %v1307 = vsel %vm159, %v1306, %v1294
    %v1308 = vrot.slane %v1294, 4
    %v1309 = vsel %vm159, %v1300, %v1308
    %v1311 = vunpack.c.l.s4 1983009808
    %v1312 = vunpack.c.0.s8 %v1311
    %v1313 = vperm.slane %v1307, %v1312
    %v1315 = vunpack.c.l.s4 1983009808
    %v1316 = vunpack.c.0.s8 %v1315
    %v1317 = vperm.slane %v1309, %v1316
    %v1318 = vrot.slane %v1303, 4
    %v1319 = vsel %vm159, %v1318, %v1297
    %v1320 = vrot.slane %v1297, 4
    %v1321 = vsel %vm159, %v1303, %v1320
    %v1323 = vunpack.c.l.s4 1983009808
    %v1324 = vunpack.c.0.s8 %v1323
    %v1325 = vperm.slane %v1319, %v1324
    %v1327 = vunpack.c.l.s4 1983009808
    %v1328 = vunpack.c.0.s8 %v1327
    %v1329 = vperm.slane %v1321, %v1328
    %v1330 = vrot.slane %v1325, 4
    %v1331 = vsel %vm159, %v1330, %v1313
    %v1332 = vrot.slane %v1313, 4
    %v1333 = vsel %vm159, %v1325, %v1332
    %v1335 = vunpack.c.l.s4 1934713408
    %v1336 = vunpack.c.0.s8 %v1335
    %v1337 = vperm.slane %v1331, %v1336
    %v1339 = vunpack.c.l.s4 1934713408
    %v1340 = vunpack.c.0.s8 %v1339
    %v1341 = vperm.slane %v1333, %v1340
    %v1342 = vrot.slane %v1329, 4
    %v1343 = vsel %vm159, %v1342, %v1317
    %v1344 = vrot.slane %v1317, 4
    %v1345 = vsel %vm159, %v1329, %v1344
    %v1347 = vunpack.c.l.s4 1934713408
    %v1348 = vunpack.c.0.s8 %v1347
    %v1349 = vperm.slane %v1343, %v1348
    %v1351 = vunpack.c.l.s4 1934713408
    %v1352 = vunpack.c.0.s8 %v1351
    %v1353 = vperm.slane %v1345, %v1352
    %v1354 = vrot.slane %v1337, 4
    %v1355 = vsel %vm159, 0.0, %v1354
    %v1356 = vrot.slane %v1341, 4
    %v1357 = vsel %vm159, 0.0, %v1356
    %v1358 = vrot.slane %v1349, 4
    %v1359 = vsel %vm159, 0.0, %v1358
    %v1360 = vrot.slane %v1353, 4
    %v1361 = vsel %vm159, 0.0, %v1360
    %v1362 = vrot.slane %v1301, 4
    %v1363 = vsel %vm159, %v1362, %v1295
    %v1364 = vrot.slane %v1295, 4
    %v1365 = vsel %vm159, %v1301, %v1364
    %v1367 = vunpack.c.l.s4 1983009808
    %v1368 = vunpack.c.0.s8 %v1367
    %v1369 = vperm.slane %v1363, %v1368
    %v1371 = vunpack.c.l.s4 1983009808
    %v1372 = vunpack.c.0.s8 %v1371
    %v1373 = vperm.slane %v1365, %v1372
    %v1374 = vrot.slane %v1304, 4
    %v1375 = vsel %vm159, %v1374, %v1298
    %v1376 = vrot.slane %v1298, 4
    %v1377 = vsel %vm159, %v1304, %v1376
    %v1379 = vunpack.c.l.s4 1983009808
    %v1380 = vunpack.c.0.s8 %v1379
    %v1381 = vperm.slane %v1375, %v1380
    %v1383 = vunpack.c.l.s4 1983009808
    %v1384 = vunpack.c.0.s8 %v1383
    %v1385 = vperm.slane %v1377, %v1384
    %v1386 = vrot.slane %v1381, 4
    %v1387 = vsel %vm159, %v1386, %v1369
    %v1388 = vrot.slane %v1369, 4
    %v1389 = vsel %vm159, %v1381, %v1388
    %v1391 = vunpack.c.l.s4 1934713408
    %v1392 = vunpack.c.0.s8 %v1391
    %v1393 = vperm.slane %v1387, %v1392
    %v1395 = vunpack.c.l.s4 1934713408
    %v1396 = vunpack.c.0.s8 %v1395
    %v1397 = vperm.slane %v1389, %v1396
    %v1398 = vrot.slane %v1385, 4
    %v1399 = vsel %vm159, %v1398, %v1373
    %v1400 = vrot.slane %v1373, 4
    %v1401 = vsel %vm159, %v1385, %v1400
    %v1403 = vunpack.c.l.s4 1934713408
    %v1404 = vunpack.c.0.s8 %v1403
    %v1405 = vperm.slane %v1399, %v1404
    %v1407 = vunpack.c.l.s4 1934713408
    %v1408 = vunpack.c.0.s8 %v1407
    %v1409 = vperm.slane %v1401, %v1408
    %v1410 = vrot.slane %v1393, 4
    %v1411 = vsel %vm159, 0.0, %v1410
    %v1412 = vrot.slane %v1397, 4
    %v1413 = vsel %vm159, 0.0, %v1412
    %v1414 = vrot.slane %v1405, 4
    %v1415 = vsel %vm159, 0.0, %v1414
    %v1416 = vrot.slane %v1409, 4
    %v1417 = vsel %vm159, 0.0, %v1416
    %v1418 = vrot.slane %v1302, 4
    %v1419 = vsel %vm159, %v1418, %v1296
    %v1421 = vunpack.c.l.s4 1983009808
    %v1422 = vunpack.c.0.s8 %v1421
    %v1423 = vperm.slane %v1419, %v1422
    %v1424 = vrot.slane %v1305, 4
    %v1425 = vsel %vm159, %v1424, %v1299
    %v1427 = vunpack.c.l.s4 1983009808
    %v1428 = vunpack.c.0.s8 %v1427
    %v1429 = vperm.slane %v1425, %v1428
    %v1430 = vrot.slane %v1429, 4
    %v1431 = vsel %vm159, %v1430, %v1423
    %v1432 = vrot.slane %v1423, 4
    %v1433 = vsel %vm159, %v1429, %v1432
    %v1435 = vunpack.c.l.s4 1934713408
    %v1436 = vunpack.c.0.s8 %v1435
    %v1437 = vperm.slane %v1431, %v1436
    %v1438 = vrot.slane %v1437, 4
    %v1439 = vsel %vm159, 0.0, %v1438
    %v1441 = vunpack.c.l.s4 1934713408
    %v1442 = vunpack.c.0.s8 %v1441
    %v1443 = vperm.slane %v1433, %v1442
    %1445 = vrot.lane.b32.xlu0 %v1355, 18
    %v1446 = vpop.permute.xlu0 %1445
    %1449 = vrot.lane.b32.xlu0 %v1341, 36
    %v1450 = vpop.permute.xlu0 %1449
    %1453 = vrot.lane.b32.xlu0 %v1357, 54
    %v1454 = vpop.permute.xlu0 %1453
    %1457 = vrot.lane.b32.xlu0 %v1349, 72
    %v1458 = vpop.permute.xlu0 %1457
    %1461 = vrot.lane.b32.xlu0 %v1359, 90
    %v1462 = vpop.permute.xlu0 %1461
    %1465 = vrot.lane.b32.xlu0 %v1353, 108
    %v1466 = vpop.permute.xlu0 %1465
    %1469 = vrot.lane.b32.xlu0 %v1361, 126
    %v1470 = vpop.permute.xlu0 %1469
    %1473 = vrot.lane.b32.xlu0 %v1393, 16
    %v1474 = vpop.permute.xlu0 %1473
    %1477 = vrot.lane.b32.xlu0 %v1411, 34
    %v1478 = vpop.permute.xlu0 %1477
    %1481 = vrot.lane.b32.xlu0 %v1397, 52
    %v1482 = vpop.permute.xlu0 %1481
    %1485 = vrot.lane.b32.xlu0 %v1413, 70
    %v1486 = vpop.permute.xlu0 %1485
    %1489 = vrot.lane.b32.xlu0 %v1405, 88
    %v1490 = vpop.permute.xlu0 %1489
    %1493 = vrot.lane.b32.xlu0 %v1415, 106
    %v1494 = vpop.permute.xlu0 %1493
    %1497 = vrot.lane.b32.xlu0 %v1409, 124
    %v1498 = vpop.permute.xlu0 %1497
    %1501 = vrot.lane.b32.xlu0 %v1417, 14
    %v1502 = vpop.permute.xlu0 %1501
    %1505 = vrot.lane.b32.xlu0 %v1437, 32
    %v1506 = vpop.permute.xlu0 %1505
    %1509 = vrot.lane.b32.xlu0 %v1439, 50
    %v1510 = vpop.permute.xlu0 %1509
    %1513 = vrot.lane.b32.xlu0 %v1443, 68
    %v1514 = vpop.permute.xlu0 %1513
    %v1516 = vsel %vm369, %v1337, %v1446
    %v1517 = vsel %vm371, %v1516, %v1450
    %v1518 = vsel %vm373, %v1517, %v1454
    %v1519 = vsel %vm375, %v1518, %v1458
    %v1520 = vsel %vm377, %v1519, %v1462
    %v1521 = vsel %vm379, %v1520, %v1466
    %v1522 = vsel %vm381, %v1521, %v1470
    %v1523 = vsel %vm383, %v1470, %v1474
    %v1524 = vsel %vm385, %v1523, %v1478
    %v1525 = vsel %vm387, %v1524, %v1482
    %v1526 = vsel %vm389, %v1525, %v1486
    %v1527 = vsel %vm391, %v1526, %v1490
    %v1528 = vsel %vm393, %v1527, %v1494
    %v1529 = vsel %vm395, %v1528, %v1498
    %v1530 = vsel %vm397, %v1498, %v1502
    %v1531 = vsel %vm399, %v1530, %v1506
    %v1532 = vsel %vm401, %v1531, %v1510
    %v1533 = vsel %vm403, %v1532, %v1514
    %v1537 = vrot.slane %v1522, 4
    %v1538 = vrot.slane %v1529, 4
    %v1539 = vrot.slane %v1533, 4
    %1540 = vrot.lane.b32.xlu0 %v1537, 127
    %v1541 = vpop.permute.xlu0 %1540
    %1542 = vrot.lane.b32.xlu0 %v1538, 127
    %v1543 = vpop.permute.xlu0 %1542
    %1544 = vrot.lane.b32.xlu0 %v1539, 127
    %v1545 = vpop.permute.xlu0 %1544
    %v1546 = vsel %vm417, %v1541, %v1543
    %v1547 = vsel %vm417, %v1543, %v1545
    %1551 = vrot.lane.b32.xlu0 %v1522, 126
    %v1552 = vpop.permute.xlu0 %1551
    %1553 = vrot.lane.b32.xlu0 %v1529, 126
    %v1554 = vpop.permute.xlu0 %1553
    %1555 = vrot.lane.b32.xlu0 %v1533, 126
    %v1556 = vpop.permute.xlu0 %1555
    %v1557 = vsel %vm381, %v1552, %v1554
    %v1558 = vsel %vm381, %v1554, %v1556
    %1562 = vrot.lane.b32.xlu0 %v1537, 110
    %v1563 = vpop.permute.xlu0 %1562
    %1564 = vrot.lane.b32.xlu0 %v1538, 110
    %v1565 = vpop.permute.xlu0 %1564
    %1566 = vrot.lane.b32.xlu0 %v1539, 110
    %v1567 = vpop.permute.xlu0 %1566
    %v1568 = vsel %vm440, %v1563, %v1565
    %v1569 = vsel %vm440, %v1565, %v1567
    %1573 = vrot.lane.b32.xlu0 %v1522, 109
    %v1574 = vpop.permute.xlu0 %1573
    %1575 = vrot.lane.b32.xlu0 %v1529, 109
    %v1576 = vpop.permute.xlu0 %1575
    %1577 = vrot.lane.b32.xlu0 %v1533, 109
    %v1578 = vpop.permute.xlu0 %1577
    %v1579 = vsel %vm452, %v1574, %v1576
    %v1580 = vsel %vm452, %v1576, %v1578
    %1584 = vrot.lane.b32.xlu0 %v1537, 108
    %v1585 = vpop.permute.xlu0 %1584
    %1586 = vrot.lane.b32.xlu0 %v1538, 108
    %v1587 = vpop.permute.xlu0 %1586
    %1588 = vrot.lane.b32.xlu0 %v1539, 108
    %v1589 = vpop.permute.xlu0 %1588
    %v1590 = vsel %vm379, %v1585, %v1587
    %v1591 = vsel %vm379, %v1587, %v1589
    %1595 = vrot.lane.b32.xlu0 %v1522, 92
    %v1596 = vpop.permute.xlu0 %1595
    %1597 = vrot.lane.b32.xlu0 %v1529, 92
    %v1598 = vpop.permute.xlu0 %1597
    %1599 = vrot.lane.b32.xlu0 %v1533, 92
    %v1600 = vpop.permute.xlu0 %1599
    %v1601 = vsel %vm475, %v1596, %v1598
    %v1602 = vsel %vm475, %v1598, %v1600
    %1606 = vrot.lane.b32.xlu0 %v1537, 91
    %v1607 = vpop.permute.xlu0 %1606
    %1608 = vrot.lane.b32.xlu0 %v1538, 91
    %v1609 = vpop.permute.xlu0 %1608
    %1610 = vrot.lane.b32.xlu0 %v1539, 91
    %v1611 = vpop.permute.xlu0 %1610
    %v1612 = vsel %vm487, %v1607, %v1609
    %v1613 = vsel %vm487, %v1609, %v1611
    %1617 = vrot.lane.b32.xlu0 %v1522, 90
    %v1618 = vpop.permute.xlu0 %1617
    %1619 = vrot.lane.b32.xlu0 %v1529, 90
    %v1620 = vpop.permute.xlu0 %1619
    %1621 = vrot.lane.b32.xlu0 %v1533, 90
    %v1622 = vpop.permute.xlu0 %1621
    %v1623 = vsel %vm377, %v1618, %v1620
    %v1624 = vsel %vm377, %v1620, %v1622
    %v1625 = vsel %vm501, %v1522, %v1546
    %v1626 = vsel %vm501, %v1529, %v1547
    %v1627 = vsel %vm501, %v1533, %v1545
    %v1628 = vsel %vm501, %v1557, %v1568
    %v1629 = vsel %vm501, %v1558, %v1569
    %v1630 = vsel %vm501, %v1556, %v1567
    %v1631 = vsel %vm501, %v1579, %v1590
    %v1632 = vsel %vm501, %v1580, %v1591
    %v1633 = vsel %vm501, %v1578, %v1589
    %v1634 = vsel %vm501, %v1601, %v1612
    %v1635 = vsel %vm501, %v1602, %v1613
    %v1636 = vsel %vm501, %v1600, %v1611
    %v1637 = vsel %vm501, %v1623, 0
    %v1639 = vsel %vm501, %v1624, 0
    %v1641 = vsel %vm501, %v1622, 0
    %1643 = vmatpush.msra.mxu0 0.0
    %1644 = vmatpush.msra.mxu0 0.0
    %1645 = vmatpush.msra.mxu0 0.0
    %1646 = vmatpush.msra.mxu0 0.0
    %1647 = vmatpush.msra.mxu0 0.0
    %1648 = vmatpush.msra.mxu0 0.0
    %1649 = vmatpush.msra.mxu0 0.0
    %1650 = vmatpush.msra.mxu0 0.0
    %1651 = vmatpush.msra.mxu0 0.0
    %1652 = vmatpush.msra.mxu0 0.0
    %1653 = vmatpush.msra.mxu0 0.0
    %1654 = vmatpush.msra.mxu0 %v1637
    %1655 = vmatpush.msra.mxu0 %v1634
    %1656 = vmatpush.msra.mxu0 %v1631
    %1657 = vmatpush.msra.mxu0 %v1628
    %1658 = vmatpush.msra.mxu0 %v1625
    %1659 = vmatmul.f32.gmra.mxu0 %v515
    %v1660 = vpop.f32.mrf.mxu0
    %v1661 = vadd.f32 0.0, %v1660
    %1662 = vdwg.mxu0
    %1663 = vmatpush.msra.mxu0 0.0
    %1664 = vmatpush.msra.mxu0 0.0
    %1665 = vmatpush.msra.mxu0 0.0
    %1666 = vmatpush.msra.mxu0 0.0
    %1667 = vmatpush.msra.mxu0 0.0
    %1668 = vmatpush.msra.mxu0 0.0
    %1669 = vmatpush.msra.mxu0 0.0
    %1670 = vmatpush.msra.mxu0 0.0
    %1671 = vmatpush.msra.mxu0 0.0
    %1672 = vmatpush.msra.mxu0 0.0
    %1673 = vmatpush.msra.mxu0 0.0
    %1674 = vmatpush.msra.mxu0 %v1639
    %1675 = vmatpush.msra.mxu0 %v1635
    %1676 = vmatpush.msra.mxu0 %v1632
    %1677 = vmatpush.msra.mxu0 %v1629
    %1678 = vmatpush.msra.mxu0 %v1626
    %1679 = vmatmul.f32.gmra.mxu0 %v515
    %v1680 = vpop.f32.mrf.mxu0
    %v1681 = vadd.f32 0.0, %v1680
    %1682 = vdwg.mxu0
    %1683 = vmatpush.msra.mxu0 0.0
    %1684 = vmatpush.msra.mxu0 0.0
    %1685 = vmatpush.msra.mxu0 0.0
    %1686 = vmatpush.msra.mxu0 0.0
    %1687 = vmatpush.msra.mxu0 0.0
    %1688 = vmatpush.msra.mxu0 0.0
    %1689 = vmatpush.msra.mxu0 0.0
    %1690 = vmatpush.msra.mxu0 0.0
    %1691 = vmatpush.msra.mxu0 0.0
    %1692 = vmatpush.msra.mxu0 0.0
    %1693 = vmatpush.msra.mxu0 0.0
    %1694 = vmatpush.msra.mxu0 %v1641
    %1695 = vmatpush.msra.mxu0 %v1636
    %1696 = vmatpush.msra.mxu0 %v1633
    %1697 = vmatpush.msra.mxu0 %v1630
    %1698 = vmatpush.msra.mxu0 %v1627
    %1699 = vmatmul.f32.gmra.mxu0 %v515
    %v1700 = vpop.f32.mrf.mxu0
    %v1701 = vadd.f32 0.0, %v1700
    %1702 = vdwg.mxu0
    %1704 = vrot.lane.b32.xlu0 %v1661, 110
    %v1705 = vpop.permute.xlu0 %1704
    %1707 = vrot.lane.b32.xlu0 %v1661, 92
    %v1708 = vpop.permute.xlu0 %1707
    %1710 = vrot.lane.b32.xlu0 %v1661, 74
    %v1711 = vpop.permute.xlu0 %1710
    %1713 = vrot.lane.b32.xlu0 %v1661, 56
    %v1714 = vpop.permute.xlu0 %1713
    %1716 = vrot.lane.b32.xlu0 %v1661, 38
    %v1717 = vpop.permute.xlu0 %1716
    %1719 = vrot.lane.b32.xlu0 %v1661, 20
    %v1720 = vpop.permute.xlu0 %1719
    %1723 = vrot.lane.b32.xlu0 %v1661, 2
    %v1724 = vpop.permute.xlu0 %1723
    %1725 = vrot.lane.b32.xlu0 %v1681, 2
    %v1726 = vpop.permute.xlu0 %1725
    %v1727 = vsel %vm607, %v1724, %v1726
    %1729 = vrot.lane.b32.xlu0 %v1681, 112
    %v1730 = vpop.permute.xlu0 %1729
    %1732 = vrot.lane.b32.xlu0 %v1681, 94
    %v1733 = vpop.permute.xlu0 %1732
    %1735 = vrot.lane.b32.xlu0 %v1681, 76
    %v1736 = vpop.permute.xlu0 %1735
    %1738 = vrot.lane.b32.xlu0 %v1681, 58
    %v1739 = vpop.permute.xlu0 %1738
    %1741 = vrot.lane.b32.xlu0 %v1681, 40
    %v1742 = vpop.permute.xlu0 %1741
    %1744 = vrot.lane.b32.xlu0 %v1681, 22
    %v1745 = vpop.permute.xlu0 %1744
    %1748 = vrot.lane.b32.xlu0 %v1681, 4
    %v1749 = vpop.permute.xlu0 %1748
    %1750 = vrot.lane.b32.xlu0 %v1701, 4
    %v1751 = vpop.permute.xlu0 %1750
    %v1752 = vsel %vm633, %v1749, %v1751
    %1754 = vrot.lane.b32.xlu0 %v1701, 114
    %v1755 = vpop.permute.xlu0 %1754
    %v1757 = vrot.slane %v1708, 4
    %v1758 = vsel %vm159, %v1757, %v1661
    %v1759 = vrot.slane %v1661, 4
    %v1760 = vsel %vm159, %v1708, %v1759
    %v1762 = vunpack.c.l.s4 1983009808
    %v1763 = vunpack.c.0.s8 %v1762
    %v1764 = vperm.slane %v1758, %v1763
    %v1766 = vunpack.c.l.s4 1983009808
    %v1767 = vunpack.c.0.s8 %v1766
    %v1768 = vperm.slane %v1760, %v1767
    %v1769 = vrot.slane %v1711, 4
    %v1770 = vsel %vm159, %v1769, %v1705
    %v1771 = vrot.slane %v1705, 4
    %v1772 = vsel %vm159, %v1711, %v1771
    %v1774 = vunpack.c.l.s4 1983009808
    %v1775 = vunpack.c.0.s8 %v1774
    %v1776 = vperm.slane %v1770, %v1775
    %v1778 = vunpack.c.l.s4 1983009808
    %v1779 = vunpack.c.0.s8 %v1778
    %v1780 = vperm.slane %v1772, %v1779
    %v1781 = vrot.slane %v1720, 4
    %v1782 = vsel %vm159, %v1781, %v1714
    %v1783 = vrot.slane %v1714, 4
    %v1784 = vsel %vm159, %v1720, %v1783
    %v1786 = vunpack.c.l.s4 1983009808
    %v1787 = vunpack.c.0.s8 %v1786
    %v1788 = vperm.slane %v1782, %v1787
    %v1790 = vunpack.c.l.s4 1983009808
    %v1791 = vunpack.c.0.s8 %v1790
    %v1792 = vperm.slane %v1784, %v1791
    %v1793 = vrot.slane %v1727, 4
    %v1794 = vsel %vm159, %v1793, %v1717
    %v1795 = vrot.slane %v1717, 4
    %v1796 = vsel %vm159, %v1727, %v1795
    %v1798 = vunpack.c.l.s4 1983009808
    %v1799 = vunpack.c.0.s8 %v1798
    %v1800 = vperm.slane %v1794, %v1799
    %v1802 = vunpack.c.l.s4 1983009808
    %v1803 = vunpack.c.0.s8 %v1802
    %v1804 = vperm.slane %v1796, %v1803
    %v1805 = vrot.slane %v1776, 4
    %v1806 = vsel %vm159, %v1805, %v1764
    %v1807 = vrot.slane %v1764, 4
    %v1808 = vsel %vm159, %v1776, %v1807
    %v1810 = vunpack.c.l.s4 1934713408
    %v1811 = vunpack.c.0.s8 %v1810
    %v1812 = vperm.slane %v1806, %v1811
    %v1814 = vunpack.c.l.s4 1934713408
    %v1815 = vunpack.c.0.s8 %v1814
    %v1816 = vperm.slane %v1808, %v1815
    %v1817 = vrot.slane %v1780, 4
    %v1818 = vsel %vm159, %v1817, %v1768
    %v1819 = vrot.slane %v1768, 4
    %v1820 = vsel %vm159, %v1780, %v1819
    %v1822 = vunpack.c.l.s4 1934713408
    %v1823 = vunpack.c.0.s8 %v1822
    %v1824 = vperm.slane %v1818, %v1823
    %v1826 = vunpack.c.l.s4 1934713408
    %v1827 = vunpack.c.0.s8 %v1826
    %v1828 = vperm.slane %v1820, %v1827
    %v1829 = vrot.slane %v1800, 4
    %v1830 = vsel %vm159, %v1829, %v1788
    %v1831 = vrot.slane %v1788, 4
    %v1832 = vsel %vm159, %v1800, %v1831
    %v1834 = vunpack.c.l.s4 1934713408
    %v1835 = vunpack.c.0.s8 %v1834
    %v1836 = vperm.slane %v1830, %v1835
    %v1838 = vunpack.c.l.s4 1934713408
    %v1839 = vunpack.c.0.s8 %v1838
    %v1840 = vperm.slane %v1832, %v1839
    %v1841 = vrot.slane %v1804, 4
    %v1842 = vsel %vm159, %v1841, %v1792
    %v1843 = vrot.slane %v1792, 4
    %v1844 = vsel %vm159, %v1804, %v1843
    %v1846 = vunpack.c.l.s4 1934713408
    %v1847 = vunpack.c.0.s8 %v1846
    %v1848 = vperm.slane %v1842, %v1847
    %v1850 = vunpack.c.l.s4 1934713408
    %v1851 = vunpack.c.0.s8 %v1850
    %v1852 = vperm.slane %v1844, %v1851
    %v1853 = vrot.slane %v1836, 4
    %v1854 = vsel %vm159, %v1853, %v1812
    %v1855 = vrot.slane %v1812, 4
    %v1856 = vsel %vm159, %v1836, %v1855
    %v1857 = vrot.slane %v1840, 4
    %v1858 = vsel %vm159, %v1857, %v1816
    %v1859 = vrot.slane %v1816, 4
    %v1860 = vsel %vm159, %v1840, %v1859
    %v1861 = vrot.slane %v1848, 4
    %v1862 = vsel %vm159, %v1861, %v1824
    %v1863 = vrot.slane %v1824, 4
    %v1864 = vsel %vm159, %v1848, %v1863
    %v1865 = vrot.slane %v1852, 4
    %v1866 = vsel %vm159, %v1865, %v1828
    %v1867 = vrot.slane %v1828, 4
    %v1868 = vsel %vm159, %v1852, %v1867
    %v1869 = vrot.slane %v1736, 4
    %v1870 = vsel %vm159, %v1869, %v1730
    %v1871 = vrot.slane %v1730, 4
    %v1872 = vsel %vm159, %v1736, %v1871
    %v1874 = vunpack.c.l.s4 1983009808
    %v1875 = vunpack.c.0.s8 %v1874
    %v1876 = vperm.slane %v1870, %v1875
    %v1878 = vunpack.c.l.s4 1983009808
    %v1879 = vunpack.c.0.s8 %v1878
    %v1880 = vperm.slane %v1872, %v1879
    %v1881 = vrot.slane %v1739, 4
    %v1882 = vsel %vm159, %v1881, %v1733
    %v1883 = vrot.slane %v1733, 4
    %v1884 = vsel %vm159, %v1739, %v1883
    %v1886 = vunpack.c.l.s4 1983009808
    %v1887 = vunpack.c.0.s8 %v1886
    %v1888 = vperm.slane %v1882, %v1887
    %v1890 = vunpack.c.l.s4 1983009808
    %v1891 = vunpack.c.0.s8 %v1890
    %v1892 = vperm.slane %v1884, %v1891
    %v1893 = vrot.slane %v1752, 4
    %v1894 = vsel %vm159, %v1893, %v1742
    %v1895 = vrot.slane %v1742, 4
    %v1896 = vsel %vm159, %v1752, %v1895
    %v1898 = vunpack.c.l.s4 1983009808
    %v1899 = vunpack.c.0.s8 %v1898
    %v1900 = vperm.slane %v1894, %v1899
    %v1902 = vunpack.c.l.s4 1983009808
    %v1903 = vunpack.c.0.s8 %v1902
    %v1904 = vperm.slane %v1896, %v1903
    %v1905 = vrot.slane %v1755, 4
    %v1906 = vsel %vm159, %v1905, %v1745
    %v1907 = vrot.slane %v1745, 4
    %v1908 = vsel %vm159, %v1755, %v1907
    %v1910 = vunpack.c.l.s4 1983009808
    %v1911 = vunpack.c.0.s8 %v1910
    %v1912 = vperm.slane %v1906, %v1911
    %v1914 = vunpack.c.l.s4 1983009808
    %v1915 = vunpack.c.0.s8 %v1914
    %v1916 = vperm.slane %v1908, %v1915
    %v1917 = vrot.slane %v1888, 4
    %v1918 = vsel %vm159, %v1917, %v1876
    %v1919 = vrot.slane %v1876, 4
    %v1920 = vsel %vm159, %v1888, %v1919
    %v1922 = vunpack.c.l.s4 1934713408
    %v1923 = vunpack.c.0.s8 %v1922
    %v1924 = vperm.slane %v1918, %v1923
    %v1926 = vunpack.c.l.s4 1934713408
    %v1927 = vunpack.c.0.s8 %v1926
    %v1928 = vperm.slane %v1920, %v1927
    %v1929 = vrot.slane %v1892, 4
    %v1930 = vsel %vm159, %v1929, %v1880
    %v1931 = vrot.slane %v1880, 4
    %v1932 = vsel %vm159, %v1892, %v1931
    %v1934 = vunpack.c.l.s4 1934713408
    %v1935 = vunpack.c.0.s8 %v1934
    %v1936 = vperm.slane %v1930, %v1935
    %v1938 = vunpack.c.l.s4 1934713408
    %v1939 = vunpack.c.0.s8 %v1938
    %v1940 = vperm.slane %v1932, %v1939
    %v1941 = vrot.slane %v1912, 4
    %v1942 = vsel %vm159, %v1941, %v1900
    %v1943 = vrot.slane %v1900, 4
    %v1944 = vsel %vm159, %v1912, %v1943
    %v1946 = vunpack.c.l.s4 1934713408
    %v1947 = vunpack.c.0.s8 %v1946
    %v1948 = vperm.slane %v1942, %v1947
    %v1950 = vunpack.c.l.s4 1934713408
    %v1951 = vunpack.c.0.s8 %v1950
    %v1952 = vperm.slane %v1944, %v1951
    %v1953 = vrot.slane %v1916, 4
    %v1954 = vsel %vm159, %v1953, %v1904
    %v1955 = vrot.slane %v1904, 4
    %v1956 = vsel %vm159, %v1916, %v1955
    %v1958 = vunpack.c.l.s4 1934713408
    %v1959 = vunpack.c.0.s8 %v1958
    %v1960 = vperm.slane %v1954, %v1959
    %v1962 = vunpack.c.l.s4 1934713408
    %v1963 = vunpack.c.0.s8 %v1962
    %v1964 = vperm.slane %v1956, %v1963
    %v1965 = vrot.slane %v1948, 4
    %v1966 = vsel %vm159, %v1965, %v1924
    %v1967 = vrot.slane %v1924, 4
    %v1968 = vsel %vm159, %v1948, %v1967
    %v1969 = vrot.slane %v1952, 4
    %v1970 = vsel %vm159, %v1969, %v1928
    %v1971 = vrot.slane %v1928, 4
    %v1972 = vsel %vm159, %v1952, %v1971
    %v1973 = vrot.slane %v1960, 4
    %v1974 = vsel %vm159, %v1973, %v1936
    %v1975 = vrot.slane %v1936, 4
    %v1976 = vsel %vm159, %v1960, %v1975
    %v1977 = vrot.slane %v1964, 4
    %v1978 = vsel %vm159, %v1977, %v1940
    %v1979 = vrot.slane %v1940, 4
    %v1980 = vsel %vm159, %v1964, %v1979
    %v1981 = vrot.slane %v1858, 4
    %v1982 = vsel %vm159, %v1981, %v1854
    %v1983 = vrot.slane %v1854, 4
    %v1984 = vsel %vm159, %v1858, %v1983
    %v1986 = vunpack.c.l.s4 1983009808
    %v1987 = vunpack.c.0.s8 %v1986
    %v1988 = vperm.slane %v1982, %v1987
    %v1990 = vunpack.c.l.s4 1983009808
    %v1991 = vunpack.c.0.s8 %v1990
    %v1992 = vperm.slane %v1984, %v1991
    %v1993 = vrot.slane %v1860, 4
    %v1994 = vsel %vm159, %v1993, %v1856
    %v1995 = vrot.slane %v1856, 4
    %v1996 = vsel %vm159, %v1860, %v1995
    %v1998 = vunpack.c.l.s4 1983009808
    %v1999 = vunpack.c.0.s8 %v1998
    %v2000 = vperm.slane %v1994, %v1999
    %v2002 = vunpack.c.l.s4 1983009808
    %v2003 = vunpack.c.0.s8 %v2002
    %v2004 = vperm.slane %v1996, %v2003
    %v2005 = vrot.slane %v1866, 4
    %v2006 = vsel %vm159, %v2005, %v1862
    %v2007 = vrot.slane %v1862, 4
    %v2008 = vsel %vm159, %v1866, %v2007
    %v2010 = vunpack.c.l.s4 1983009808
    %v2011 = vunpack.c.0.s8 %v2010
    %v2012 = vperm.slane %v2006, %v2011
    %v2014 = vunpack.c.l.s4 1983009808
    %v2015 = vunpack.c.0.s8 %v2014
    %v2016 = vperm.slane %v2008, %v2015
    %v2017 = vrot.slane %v1868, 4
    %v2018 = vsel %vm159, %v2017, %v1864
    %v2019 = vrot.slane %v1864, 4
    %v2020 = vsel %vm159, %v1868, %v2019
    %v2022 = vunpack.c.l.s4 1983009808
    %v2023 = vunpack.c.0.s8 %v2022
    %v2024 = vperm.slane %v2018, %v2023
    %v2026 = vunpack.c.l.s4 1983009808
    %v2027 = vunpack.c.0.s8 %v2026
    %v2028 = vperm.slane %v2020, %v2027
    %v2029 = vrot.slane %v2000, 4
    %v2030 = vsel %vm159, %v2029, %v1988
    %v2031 = vrot.slane %v1988, 4
    %v2032 = vsel %vm159, %v2000, %v2031
    %v2034 = vunpack.c.l.s4 1934713408
    %v2035 = vunpack.c.0.s8 %v2034
    %v2036 = vperm.slane %v2030, %v2035
    %v2038 = vunpack.c.l.s4 1934713408
    %v2039 = vunpack.c.0.s8 %v2038
    %v2040 = vperm.slane %v2032, %v2039
    %v2041 = vrot.slane %v2004, 4
    %v2042 = vsel %vm159, %v2041, %v1992
    %v2043 = vrot.slane %v1992, 4
    %v2044 = vsel %vm159, %v2004, %v2043
    %v2046 = vunpack.c.l.s4 1934713408
    %v2047 = vunpack.c.0.s8 %v2046
    %v2048 = vperm.slane %v2042, %v2047
    %v2050 = vunpack.c.l.s4 1934713408
    %v2051 = vunpack.c.0.s8 %v2050
    %v2052 = vperm.slane %v2044, %v2051
    %v2053 = vrot.slane %v2024, 4
    %v2054 = vsel %vm159, %v2053, %v2012
    %v2055 = vrot.slane %v2012, 4
    %v2056 = vsel %vm159, %v2024, %v2055
    %v2058 = vunpack.c.l.s4 1934713408
    %v2059 = vunpack.c.0.s8 %v2058
    %v2060 = vperm.slane %v2054, %v2059
    %v2062 = vunpack.c.l.s4 1934713408
    %v2063 = vunpack.c.0.s8 %v2062
    %v2064 = vperm.slane %v2056, %v2063
    %v2065 = vrot.slane %v2028, 4
    %v2066 = vsel %vm159, %v2065, %v2016
    %v2067 = vrot.slane %v2016, 4
    %v2068 = vsel %vm159, %v2028, %v2067
    %v2070 = vunpack.c.l.s4 1934713408
    %v2071 = vunpack.c.0.s8 %v2070
    %v2072 = vperm.slane %v2066, %v2071
    %v2074 = vunpack.c.l.s4 1934713408
    %v2075 = vunpack.c.0.s8 %v2074
    %v2076 = vperm.slane %v2068, %v2075
    %v2077 = vrot.slane %v2060, 4
    %v2078 = vsel %vm159, %v2077, %v2036
    %v2079 = vrot.slane %v2036, 4
    %v2080 = vsel %vm159, %v2060, %v2079
    %v2081 = vrot.slane %v2064, 4
    %v2082 = vsel %vm159, %v2081, %v2040
    %v2083 = vrot.slane %v2040, 4
    %v2084 = vsel %vm159, %v2064, %v2083
    %v2085 = vrot.slane %v2072, 4
    %v2086 = vsel %vm159, %v2085, %v2048
    %v2087 = vrot.slane %v2048, 4
    %v2088 = vsel %vm159, %v2072, %v2087
    %v2089 = vrot.slane %v2076, 4
    %v2090 = vsel %vm159, %v2089, %v2052
    %v2091 = vrot.slane %v2052, 4
    %v2092 = vsel %vm159, %v2076, %v2091
    %v2093 = vrot.slane %v1970, 4
    %v2094 = vsel %vm159, %v2093, %v1966
    %v2095 = vrot.slane %v1966, 4
    %v2096 = vsel %vm159, %v1970, %v2095
    %v2098 = vunpack.c.l.s4 1983009808
    %v2099 = vunpack.c.0.s8 %v2098
    %v2100 = vperm.slane %v2094, %v2099
    %v2102 = vunpack.c.l.s4 1983009808
    %v2103 = vunpack.c.0.s8 %v2102
    %v2104 = vperm.slane %v2096, %v2103
    %v2105 = vrot.slane %v1972, 4
    %v2106 = vsel %vm159, %v2105, %v1968
    %v2107 = vrot.slane %v1968, 4
    %v2108 = vsel %vm159, %v1972, %v2107
    %v2110 = vunpack.c.l.s4 1983009808
    %v2111 = vunpack.c.0.s8 %v2110
    %v2112 = vperm.slane %v2106, %v2111
    %v2114 = vunpack.c.l.s4 1983009808
    %v2115 = vunpack.c.0.s8 %v2114
    %v2116 = vperm.slane %v2108, %v2115
    %v2117 = vrot.slane %v1978, 4
    %v2118 = vsel %vm159, %v2117, %v1974
    %v2119 = vrot.slane %v1974, 4
    %v2120 = vsel %vm159, %v1978, %v2119
    %v2122 = vunpack.c.l.s4 1983009808
    %v2123 = vunpack.c.0.s8 %v2122
    %v2124 = vperm.slane %v2118, %v2123
    %v2126 = vunpack.c.l.s4 1983009808
    %v2127 = vunpack.c.0.s8 %v2126
    %v2128 = vperm.slane %v2120, %v2127
    %v2129 = vrot.slane %v1980, 4
    %v2130 = vsel %vm159, %v2129, %v1976
    %v2131 = vrot.slane %v1976, 4
    %v2132 = vsel %vm159, %v1980, %v2131
    %v2134 = vunpack.c.l.s4 1983009808
    %v2135 = vunpack.c.0.s8 %v2134
    %v2136 = vperm.slane %v2130, %v2135
    %v2138 = vunpack.c.l.s4 1983009808
    %v2139 = vunpack.c.0.s8 %v2138
    %v2140 = vperm.slane %v2132, %v2139
    %v2141 = vrot.slane %v2112, 4
    %v2142 = vsel %vm159, %v2141, %v2100
    %v2143 = vrot.slane %v2100, 4
    %v2144 = vsel %vm159, %v2112, %v2143
    %v2146 = vunpack.c.l.s4 1934713408
    %v2147 = vunpack.c.0.s8 %v2146
    %v2148 = vperm.slane %v2142, %v2147
    %v2150 = vunpack.c.l.s4 1934713408
    %v2151 = vunpack.c.0.s8 %v2150
    %v2152 = vperm.slane %v2144, %v2151
    %v2153 = vrot.slane %v2116, 4
    %v2154 = vsel %vm159, %v2153, %v2104
    %v2155 = vrot.slane %v2104, 4
    %v2156 = vsel %vm159, %v2116, %v2155
    %v2158 = vunpack.c.l.s4 1934713408
    %v2159 = vunpack.c.0.s8 %v2158
    %v2160 = vperm.slane %v2154, %v2159
    %v2162 = vunpack.c.l.s4 1934713408
    %v2163 = vunpack.c.0.s8 %v2162
    %v2164 = vperm.slane %v2156, %v2163
    %v2165 = vrot.slane %v2136, 4
    %v2166 = vsel %vm159, %v2165, %v2124
    %v2167 = vrot.slane %v2124, 4
    %v2168 = vsel %vm159, %v2136, %v2167
    %v2170 = vunpack.c.l.s4 1934713408
    %v2171 = vunpack.c.0.s8 %v2170
    %v2172 = vperm.slane %v2166, %v2171
    %v2174 = vunpack.c.l.s4 1934713408
    %v2175 = vunpack.c.0.s8 %v2174
    %v2176 = vperm.slane %v2168, %v2175
    %v2177 = vrot.slane %v2140, 4
    %v2178 = vsel %vm159, %v2177, %v2128
    %v2179 = vrot.slane %v2128, 4
    %v2180 = vsel %vm159, %v2140, %v2179
    %v2182 = vunpack.c.l.s4 1934713408
    %v2183 = vunpack.c.0.s8 %v2182
    %v2184 = vperm.slane %v2178, %v2183
    %v2186 = vunpack.c.l.s4 1934713408
    %v2187 = vunpack.c.0.s8 %v2186
    %v2188 = vperm.slane %v2180, %v2187
    %v2189 = vrot.slane %v2172, 4
    %v2190 = vsel %vm159, %v2189, %v2148
    %v2191 = vrot.slane %v2148, 4
    %v2192 = vsel %vm159, %v2172, %v2191
    %v2193 = vrot.slane %v2176, 4
    %v2194 = vsel %vm159, %v2193, %v2152
    %v2195 = vrot.slane %v2152, 4
    %v2196 = vsel %vm159, %v2176, %v2195
    %v2197 = vrot.slane %v2184, 4
    %v2198 = vsel %vm159, %v2197, %v2160
    %v2199 = vrot.slane %v2160, 4
    %v2200 = vsel %vm159, %v2184, %v2199
    %v2201 = vrot.slane %v2188, 4
    %v2202 = vsel %vm159, %v2201, %v2164
    %v2203 = vrot.slane %v2164, 4
    %v2204 = vsel %vm159, %v2188, %v2203
    %2206 = vrot.lane.b32.xlu0 %v2080, 16
    %v2207 = vpop.permute.xlu0 %2206
    %2210 = vrot.lane.b32.xlu0 %v2082, 32
    %v2211 = vpop.permute.xlu0 %2210
    %2214 = vrot.lane.b32.xlu0 %v2084, 48
    %v2215 = vpop.permute.xlu0 %2214
    %2218 = vrot.lane.b32.xlu0 %v2086, 64
    %v2219 = vpop.permute.xlu0 %2218
    %2222 = vrot.lane.b32.xlu0 %v2088, 80
    %v2223 = vpop.permute.xlu0 %2222
    %2226 = vrot.lane.b32.xlu0 %v2090, 96
    %v2227 = vpop.permute.xlu0 %2226
    %2230 = vrot.lane.b32.xlu0 %v2092, 112
    %v2231 = vpop.permute.xlu0 %2230
    %2234 = vrot.lane.b32.xlu0 %v2192, 16
    %v2235 = vpop.permute.xlu0 %2234
    %2238 = vrot.lane.b32.xlu0 %v2194, 32
    %v2239 = vpop.permute.xlu0 %2238
    %2242 = vrot.lane.b32.xlu0 %v2196, 48
    %v2243 = vpop.permute.xlu0 %2242
    %2246 = vrot.lane.b32.xlu0 %v2198, 64
    %v2247 = vpop.permute.xlu0 %2246
    %2250 = vrot.lane.b32.xlu0 %v2200, 80
    %v2251 = vpop.permute.xlu0 %2250
    %2254 = vrot.lane.b32.xlu0 %v2202, 96
    %v2255 = vpop.permute.xlu0 %2254
    %2258 = vrot.lane.b32.xlu0 %v2204, 112
    %v2259 = vpop.permute.xlu0 %2258
    %v2261 = vsel %vm383, %v2078, %v2207
    %v2262 = vsel %vm399, %v2261, %v2211
    %v2263 = vsel %vm1145, %v2262, %v2215
    %v2264 = vsel %vm1147, %v2263, %v2219
    %v2265 = vsel %vm1149, %v2264, %v2223
    %v2266 = vsel %vm1151, %v2265, %v2227
    %v2267 = vsel %vm1153, %v2266, %v2231
    %v2268 = vsel %vm383, %v2190, %v2235
    %v2269 = vsel %vm399, %v2268, %v2239
    %v2270 = vsel %vm1145, %v2269, %v2243
    %v2271 = vsel %vm1147, %v2270, %v2247
    %v2272 = vsel %vm1149, %v2271, %v2251
    %v2273 = vsel %vm1151, %v2272, %v2255
    %v2274 = vsel %vm1153, %v2273, %v2259
    %v2275 = vadd.f32 %v2267, %v2274
    %2276 = vadd.xlane.f32.xlu0 %v2275
    %v2277 = vpop.xlane.xlu0 %2276
    %v2278 = vmul.f32 %v2277, 0.00390625
    %v2279 = vmul.f32 %v2267, %v2267
    %v2280 = vmul.f32 %v2274, %v2274
    %v2281 = vadd.f32 %v2279, %v2280
    %2282 = vadd.xlane.f32.xlu0 %v2281
    %v2283 = vpop.xlane.xlu0 %2282
    %v2284 = vmul.f32 %v2283, 0.00390625
    %v2285 = vmul.f32 %v2278, %v2278
    %v2286 = vsub.f32 %v2284, %v2285
    %v2287 = vsub.f32 %v2267, %v2278
    %v2288 = vsub.f32 %v2274, %v2278
    %v2289 = vadd.f32 %v2286, 1e-05
    %v2290 = vrsqrt.pop %v2289
    %v2291 = vmul.f32 %v2290, %v2289
    %v2292 = vmul.f32 %v2291, %v2290
    %v2293 = vmul.f32 0.5, %v2292
    %v2294 = vsub.f32 1.5, %v2293
    %v2295 = vmul.f32 %v2290, %v2294
    %vm2296 = vweird.f32 %v2289
    %vm2297 = vweird.f32 %v2290
    %vm2298 = vmor %vm2296, %vm2297
    %v2299 = vsel %vm2298, %v2290, %v2295
    %v2300 = vmul.f32 %v2287, %v2299
    %v2301 = vmul.f32 %v2288, %v2299
    %v2302 = vmax.f32 %v2300, 0.0
    %v2303 = vmax.f32 %v2301, 0.0
    %s2304 = scalar_lea.vmem [#allocation7], 16
    %2305 = vst [vmem:[%s2304] sm:$0xff] %v2302
    %2306 = vst [vmem:[%s2304 + $0x8] sm:$0xff] %v2303
    // Predicated region
    $region18: #{tpu_custom_call.1} parent=1 // pred_check
      _
    $region19: #{tpu_custom_call.1} parent=1 // pred_check_branch
      %2308 = sbr.rel (0) target = $region21
    $region20: #{tpu_custom_call.1} parent=1 // pred_region
      %2310 = vsyncadd [#allocation4], 0
      %s2311 = sshll.u32 [#allocation7], 4
      %s2312 = int_to_ptr.vmem [resolvable:$true] %s2311
      %s2313 = sshll.u32 %s2, 4
      %s2314 = int_to_ptr.hbm [resolvable:$true] %s2313
      %2319 = dma.vmem_to_hbm [thread:$0]  %s2312, 512, %s2314, [#allocation4], 256, 256, 16
    $region21: #{tpu_custom_call.1} parent=1 // pred_fallthru
      _
    // Predicated region
    $region22: #{tpu_custom_call.1} parent=1 // pred_check
      _
    $region23: #{tpu_custom_call.1} parent=1 // pred_check_branch
      %2321 = sbr.rel (0) target = $region25
    $region24: #{tpu_custom_call.1} parent=1 // pred_region
      %2323 = dma.done [#allocation4], 512
    $region25: #{tpu_custom_call.1} parent=1 // pred_fallthru
      _
    %2324 = vsyncpa [#allocation3], 1
    %2325 = vsyncpa [#allocation6], 1
    %2326 = vsyncpa [#allocation4], 1

</llo_original>
